<compile_context>
chip_gen: v7x
topology: tpu7x:2x2x1
jax: 0.10.0
libtpu: 0.0.40
codegen_flags: <defaults>
</compile_context>

<pallas_src>
import functools
from typing import NamedTuple

import jax
import jax.numpy as jnp
from jax.experimental import pallas as pl
from jax.experimental.pallas import tpu as pltpu


_MiB = 1024 * 1024
_VMEM_BUDGET = 44 * _MiB        # sizing budget (v7x has only 64 MiB/TC physical)
_VMEM_LIMIT_CAP = 56 * _MiB     # never request the full 64 MiB on v7x
_RESIDENT_BUDGET = 28 * _MiB    # keep W1 VMEM-resident if all weights fit here
_STREAM_K_TILE = 512            # K tile when W1 must be streamed from HBM
_MAX_BATCH_TILE = 1024          # raised from 256 (roofline: need >=512-1024 rows)


def _round_up(n, m):
    return (n + m - 1) // m * m


class EncoderConfig(NamedTuple):
    in_dim: int
    in_pad: int
    hid_pad: int
    out_pad: int
    k_tile: int
    w1_resident: bool
    input_residual: bool


def _pick_batch_tiling(B, bt_max):
    """Return (batch_tile, num_b): batch_tile a multiple of 8, num_b == 1 or even
    so the 'parallel' batch axis shards evenly across v7x's two TensorCores."""
    B8 = _round_up(max(B, 1), 8)
    bt_max = max(8, min(bt_max, _MAX_BATCH_TILE) // 8 * 8)
    if B8 <= bt_max:
        return B8, 1
    nb = 2
    while True:
        bt = _round_up(-(-B8 // nb), 8)          # ceil divide, rounded to 8
        if bt <= bt_max:
            return bt, nb
        nb += 2


# ----------------------------------------------------------------------------
# kernels
# ----------------------------------------------------------------------------
def _encoder_kernel_resident(x_ref, w1_ref, w2_ref, w3_ref, wo_ref, b_ref,
                             out_ref, *, hid_pad, out2, input_residual):
    """All weights VMEM-resident; grid = (num_b,). No accumulator round-trip."""
    xb = x_ref[...]                                         # (bt, in_pad) bf16
    b1 = b_ref[:, 0 * hid_pad:1 * hid_pad]
    b2 = b_ref[:, 1 * hid_pad:2 * hid_pad]
    b3 = b_ref[:, 2 * hid_pad:3 * hid_pad]
    bo = b_ref[:, 3 * hid_pad:3 * hid_pad + out2]

    # Input layer (Linear / ResLinear) + ReLU: bf16 MXU operands, f32 accumulation.
    h = jnp.dot(xb, w1_ref[...], preferred_element_type=jnp.float32) + b1
    if input_residual:
        # ResLinear input layer (in_dim == hidden). NOTE: the residual uses the
        # bf16-rounded x (module adds f32 x) -- within bf16 tolerance.
        h = h + xb.astype(jnp.float32)
    h = jnp.maximum(h, 0.0)

    # Hidden ResLinear + ReLU layers; bias/residual adds stay in f32.
    t = jnp.dot(h.astype(jnp.bfloat16), w2_ref[...],
                preferred_element_type=jnp.float32) + b2 + h
    h = jnp.maximum(t, 0.0)
    t = jnp.dot(h.astype(jnp.bfloat16), w3_ref[...],
                preferred_element_type=jnp.float32) + b3 + h
    h = jnp.maximum(t, 0.0)

    # Fused mean | log_var head: one lane-dense (hid_pad, 2*out_pad) matmul.
    out_ref[...] = (jnp.dot(h.astype(jnp.bfloat16), wo_ref[...],
                            preferred_element_type=jnp.float32) + bo)


def _encoder_kernel_streamed(x_ref, w1_ref, w2_ref, w3_ref, wo_ref, b_ref,
                             out_ref, acc_ref, *, hid_pad, out2):
    """Large in_dim: W1 streamed over the (last, 'arbitrary') K grid axis."""
    k = pl.program_id(1)

    @pl.when(k == 0)
    def _():
        acc_ref[...] = jnp.zeros_like(acc_ref)

    # Layer-1 partial product: bf16 operands on the MXU, f32 accumulation.
    acc_ref[...] += jnp.dot(x_ref[...], w1_ref[...],
                            preferred_element_type=jnp.float32)

    @pl.when(k == pl.num_programs(1) - 1)
    def _():
        b1 = b_ref[:, 0 * hid_pad:1 * hid_pad]
        b2 = b_ref[:, 1 * hid_pad:2 * hid_pad]
        b3 = b_ref[:, 2 * hid_pad:3 * hid_pad]
        bo = b_ref[:, 3 * hid_pad:3 * hid_pad + out2]

        h = jnp.maximum(acc_ref[...] + b1, 0.0)
        t = jnp.dot(h.astype(jnp.bfloat16), w2_ref[...],
                    preferred_element_type=jnp.float32) + b2 + h
        h = jnp.maximum(t, 0.0)
        t = jnp.dot(h.astype(jnp.bfloat16), w3_ref[...],
                    preferred_element_type=jnp.float32) + b3 + h
        h = jnp.maximum(t, 0.0)
        out_ref[...] = (jnp.dot(h.astype(jnp.bfloat16), wo_ref[...],
                                preferred_element_type=jnp.float32) + bo)


# ----------------------------------------------------------------------------
# wrapper
# ----------------------------------------------------------------------------
@functools.partial(jax.jit,
                   static_argnames=("out_dim", "cfg", "custom_buffering"))
def _forward_impl(x, padded_params, *, out_dim, cfg, custom_buffering):
    w1, w2, w3, wo, ball = padded_params
    B, in_dim = x.shape
    assert in_dim == cfg.in_dim
    in_pad, hid_pad, out_pad, k_tile = cfg.in_pad, cfg.hid_pad, cfg.out_pad, cfg.k_tile
    out2 = 2 * out_pad
    bwidth = ball.shape[1]

    if cfg.input_residual and not cfg.w1_resident:
        # TODO(synk): ResLinear input layer with an HBM-streamed W1 is unsupported
        # (needs the full x row for the residual); unreachable for sane hidden sizes.
        raise NotImplementedError("input ResLinear requires a VMEM-resident W1")

    # ---- VMEM budgeting & batch tiling --------------------------------------
    wbuf = 1 if custom_buffering else 2              # resident weights buffering
    bias_bytes = 8 * bwidth * 4                      # (1,N) pads to 8 sublanes
    resident_bytes = wbuf * ((2 * hid_pad * hid_pad + hid_pad * out2) * 2 + bias_bytes)
    if cfg.w1_resident:
        resident_bytes += wbuf * in_pad * hid_pad * 2
        # x (double-buffered bf16) + out (double-buffered f32) + ~5 f32 hid temps
        per_row = 2 * in_pad * 2 + 2 * out2 * 4 + 5 * hid_pad * 4
    else:
        stream_buf = 3 if custom_buffering else 2
        resident_bytes += stream_buf * k_tile * hid_pad * 2       # streamed W1 tiles
        # streamed x + out + acc scratch + temps
        per_row = stream_buf * k_tile * 2 + 2 * out2 * 4 + 6 * hid_pad * 4

    bt_max = (_VMEM_BUDGET - resident_bytes) // per_row
    batch_tile, num_b = _pick_batch_tiling(B, bt_max)
    B_pad = batch_tile * num_b
    num_k = in_pad // k_tile

    vmem_est = resident_bytes + batch_tile * per_row
    vmem_limit = int(min(max(int(vmem_est * 1.25), 32 * _MiB), _VMEM_LIMIT_CAP))

    # ---- pad/cast x with one fused pad+convert -------------------------------
    xb = x.astype(jnp.bfloat16)
    if B_pad != B or in_pad != in_dim:
        xb = jnp.pad(xb, ((0, B_pad - B), (0, in_pad - in_dim)))

    # ---- scheduling hints -----------------------------------------------------
    flops = 2 * B_pad * (in_pad * hid_pad + 2 * hid_pad * hid_pad + hid_pad * out2)
    w1_reads = 1 if cfg.w1_resident else num_b       # streamed W1 re-read per batch tile
    bytes_accessed = (B_pad * in_pad * 2
                      + w1_reads * in_pad * hid_pad * 2
                      + (2 * hid_pad * hid_pad + hid_pad * out2) * 2
                      + bwidth * 4
                      + B_pad * out2 * 4)

    res_kw = dict(pipeline_mode=pl.Buffered(1)) if custom_buffering else {}
    stream_kw = dict(pipeline_mode=pl.Buffered(3)) if custom_buffering else {}

    if cfg.w1_resident:
        kernel = functools.partial(_encoder_kernel_resident, hid_pad=hid_pad,
                                   out2=out2, input_residual=cfg.input_residual)
        grid_spec = pltpu.PrefetchScalarGridSpec(
            num_scalar_prefetch=0,
            grid=(num_b,),
            in_specs=[
                pl.BlockSpec((batch_tile, in_pad), lambda i: (i, 0)),          # x
                pl.BlockSpec((in_pad, hid_pad), lambda i: (0, 0), **res_kw),   # W1 resident
                pl.BlockSpec((hid_pad, hid_pad), lambda i: (0, 0), **res_kw),  # W2
                pl.BlockSpec((hid_pad, hid_pad), lambda i: (0, 0), **res_kw),  # W3
                pl.BlockSpec((hid_pad, out2), lambda i: (0, 0), **res_kw),     # Wout
                pl.BlockSpec((1, bwidth), lambda i: (0, 0), **res_kw),         # biases
            ],
            out_specs=pl.BlockSpec((batch_tile, out2), lambda i: (i, 0)),
            scratch_shapes=[],
        )
        dim_sem = ("parallel",)
    else:
        kernel = functools.partial(_encoder_kernel_streamed, hid_pad=hid_pad, out2=out2)
        grid_spec = pltpu.PrefetchScalarGridSpec(
            num_scalar_prefetch=0,
            grid=(num_b, num_k),                     # reduction (K) axis last
            in_specs=[
                pl.BlockSpec((batch_tile, k_tile), lambda i, k: (i, k), **stream_kw),
                pl.BlockSpec((k_tile, hid_pad), lambda i, k: (k, 0), **stream_kw),
                pl.BlockSpec((hid_pad, hid_pad), lambda i, k: (0, 0), **res_kw),
                pl.BlockSpec((hid_pad, hid_pad), lambda i, k: (0, 0), **res_kw),
                pl.BlockSpec((hid_pad, out2), lambda i, k: (0, 0), **res_kw),
                pl.BlockSpec((1, bwidth), lambda i, k: (0, 0), **res_kw),
            ],
            out_specs=pl.BlockSpec((batch_tile, out2), lambda i, k: (i, 0)),
            scratch_shapes=[pltpu.VMEM((batch_tile, hid_pad), jnp.float32)],
        )
        dim_sem = ("parallel", "arbitrary")

    out = pl.pallas_call(
        kernel,
        out_shape=jax.ShapeDtypeStruct((B_pad, out2), jnp.float32),
        grid_spec=grid_spec,
        compiler_params=pltpu.CompilerParams(
            dimension_semantics=dim_sem,
            vmem_limit_bytes=vmem_limit),
        cost_estimate=pl.CostEstimate(
            flops=flops, transcendentals=0, bytes_accessed=bytes_accessed),
    )(xb, w1, w2, w3, wo, ball)

    mean = out[:B, :out_dim]
    log_var = out[:B, out_pad:out_pad + out_dim]
    return mean, log_var


def vae_encoder_forward(x, padded_params, cfg, *, out_dim):
    """VAEEncoder.forward. Tries single-buffered resident weights / 3-deep
    streamed buffers first; falls back to default double-buffering if this
    jax/libtpu build rejects pipeline_mode=pl.Buffered (library-safe fallback)."""
    try:
        return _forward_impl(x, padded_params, out_dim=out_dim, cfg=cfg,
                             custom_buffering=True)
    except Exception:
        return _forward_impl(x, padded_params, out_dim=out_dim, cfg=cfg,
                             custom_buffering=False)


# ----------------------------------------------------------------------------
# parameter preparation (padding to 128 lanes, bf16 weights, fused head/biases)
# ----------------------------------------------------------------------------
def prepare_params(params):
    """params = (W1,b1,W2,b2,W3,b3,Wm,bm,Wv,bv); weights stored (in, out)."""
    w1, b1, w2, b2, w3, b3, wm, bm, wv, bv = params
    in_dim, hidden = w1.shape
    out_dim = wm.shape[1]

    hid_pad = _round_up(hidden, 128)
    out_pad = _round_up(out_dim, 128)
    out2 = 2 * out_pad
    in_pad128 = _round_up(in_dim, 128)

    # Decide whether W1 (the only potentially-large weight) stays VMEM resident.
    bias_bytes = 8 * (3 * hid_pad + out2) * 4
    weight_bytes = (in_pad128 * hid_pad + 2 * hid_pad * hid_pad
                    + hid_pad * out2) * 2 + bias_bytes
    w1_resident = weight_bytes <= _RESIDENT_BUDGET

    if w1_resident:
        in_pad = in_pad128
        k_tile = in_pad
    else:
        # Stream W1 over K: pad in_dim up to a multiple of the target K tile so we
        # never degenerate to many 128-wide K steps (zero padding is exact).
        k_tile = _STREAM_K_TILE
        in_pad = _round_up(in_dim, k_tile)

    def padw(w, r, c):
        wp = jnp.asarray(w, jnp.bfloat16)
        return jnp.pad(wp, ((0, r - w.shape[0]), (0, c - w.shape[1])))

    w1p = padw(w1, in_pad, hid_pad)
    w2p = padw(w2, hid_pad, hid_pad)
    w3p = padw(w3, hid_pad, hid_pad)

    # Fuse the mean & var heads into one lane-dense output matmul.
    wop = jnp.zeros((hid_pad, out2), jnp.bfloat16)
    wop = wop.at[:hidden, :out_dim].set(wm.astype(jnp.bfloat16))
    wop = wop.at[:hidden, out_pad:out_pad + out_dim].set(wv.astype(jnp.bfloat16))

    # All biases fused into one resident f32 row: [b1 | b2 | b3 | bm | bv].
    ball = jnp.zeros((1, 3 * hid_pad + out2), jnp.float32)
    ball = ball.at[0, 0:hidden].set(b1.reshape(-1).astype(jnp.float32))
    ball = ball.at[0, hid_pad:hid_pad + hidden].set(b2.reshape(-1).astype(jnp.float32))
    ball = ball.at[0, 2 * hid_pad:2 * hid_pad + hidden].set(b3.reshape(-1).astype(jnp.float32))
    ball = ball.at[0, 3 * hid_pad:3 * hid_pad + out_dim].set(bm.reshape(-1).astype(jnp.float32))
    ball = ball.at[0, 3 * hid_pad + out_pad:3 * hid_pad + out_pad + out_dim].set(
        bv.reshape(-1).astype(jnp.float32))

    cfg = EncoderConfig(in_dim=in_dim, in_pad=in_pad, hid_pad=hid_pad,
                        out_pad=out_pad, k_tile=k_tile, w1_resident=w1_resident,
                        input_residual=(in_dim == hidden))
    padded = (w1p, w2p, w3p, wop, ball)
    return padded, cfg


# ----------------------------------------------------------------------------
# references & demo
# ----------------------------------------------------------------------------
def init_linear(key, fan_in, fan_out):
    """PyTorch nn.Linear default init; weight returned transposed (in, out)."""
    kw, kb = jax.random.split(key)
    bound = 1.0 / float(jnp.sqrt(jnp.float32(fan_in)))
    w = jax.random.uniform(kw, (fan_in, fan_out), jnp.float32, -bound, bound)
    b = jax.random.uniform(kb, (fan_out,), jnp.float32, -bound, bound)
    return w, b


def reference_forward_f32(x, params, input_residual):
    w1, b1, w2, b2, w3, b3, wm, bm, wv, bv = params
    h = x @ w1 + b1
    if input_residual:
        h = h + x
    h = jax.nn.relu(h)
    h = jax.nn.relu(h @ w2 + b2 + h)
    h = jax.nn.relu(h @ w3 + b3 + h)
    return h @ wm + bm, h @ wv + bv


def reference_forward_bf16(x, params, input_residual):
    """Emulates the kernel's numerics: bf16 operands, f32 accumulation."""
    w1, b1, w2, b2, w3, b3, wm, bm, wv, bv = params

    def mm(a, w):
        return jnp.dot(a.astype(jnp.bfloat16), w.astype(jnp.bfloat16),
                       preferred_element_type=jnp.float32)

    h = mm(x, w1) + b1
    if input_residual:
        h = h + x.astype(jnp.bfloat16).astype(jnp.float32)
    h = jax.nn.relu(h)
    h = jax.nn.relu(mm(h, w2) + b2 + h)
    h = jax.nn.relu(mm(h, w3) + b3 + h)
    return mm(h, wm) + bm, mm(h, wv) + bv


def _run_case(key, B, in_dim, hidden, out_dim):
    kx, k1, k2, k3, km, kv = jax.random.split(key, 6)
    x = jax.random.normal(kx, (B, in_dim), jnp.float32)
    w1, b1 = init_linear(k1, in_dim, hidden)
    w2, b2 = init_linear(k2, hidden, hidden)
    w3, b3 = init_linear(k3, hidden, hidden)
    wm, bm = init_linear(km, hidden, out_dim)
    wv, bv = init_linear(kv, hidden, out_dim)
    params = (w1, b1, w2, b2, w3, b3, wm, bm, wv, bv)

    padded, cfg = prepare_params(params)
    mean, log_var = vae_encoder_forward(x, padded, cfg, out_dim=out_dim)
    mean, log_var = jax.block_until_ready((mean, log_var))
    assert mean.shape == (B, out_dim) and log_var.shape == (B, out_dim)

    # Apples-to-apples check against a bf16-emulating reference.
    rm_b, rv_b = reference_forward_bf16(x, params, cfg.input_residual)
    assert jnp.allclose(mean, rm_b, atol=2e-3, rtol=2e-3)
    assert jnp.allclose(log_var, rv_b, atol=2e-3, rtol=2e-3)

    # Sanity check against the full-precision reference (bf16 tolerance).
    rm, rv = reference_forward_f32(x, params, cfg.input_residual)
    assert jnp.allclose(mean, rm, atol=5e-2, rtol=5e-2)
    assert jnp.allclose(log_var, rv, atol=5e-2, rtol=5e-2)


if __name__ == "__main__":
    key = jax.random.PRNGKey(0)
    ka, kb = jax.random.split(key)
    # Linear input layer (in_dim != hidden): VAEEncoder(in_dim=96, hidden_dim=32, out_dim=8)
    _run_case(ka, B=16, in_dim=96, hidden=32, out_dim=8)
    # ResLinear input layer (in_dim == hidden): VAEEncoder(in_dim=32, hidden_dim=32, out_dim=8)
    _run_case(kb, B=16, in_dim=32, hidden=32, out_dim=8)
    print("KERNEL_OK")
</pallas_src>

<mosaic_0001>
module attributes {stable_mosaic.version = 11 : i64} {
  func.func @_encoder_kernel_resident(%arg0: i32, %arg1: memref<16x128xbf16, #tpu.memory_space<vmem>>, %arg2: memref<128x128xbf16, #tpu.memory_space<vmem>>, %arg3: memref<128x128xbf16, #tpu.memory_space<vmem>>, %arg4: memref<128x128xbf16, #tpu.memory_space<vmem>>, %arg5: memref<128x256xbf16, #tpu.memory_space<vmem>>, %arg6: memref<1x640xf32, #tpu.memory_space<vmem>>, %arg7: memref<16x256xf32, #tpu.memory_space<vmem>>) attributes {dimension_semantics = [#tpu.dimension_semantics<parallel>], iteration_bounds = array<i64: 1>, scalar_prefetch = 0 : i64, scratch_operands = 0 : i64, tpu.core_type = #tpu.core_type<tc>, window_params = [{transform_indices = @transform_0, window_bounds = array<i64: 16, 128>}, {pipeline_mode = #tpu.pipeline_mode<synchronous>, transform_indices = @transform_1, window_bounds = array<i64: 128, 128>}, {pipeline_mode = #tpu.pipeline_mode<synchronous>, transform_indices = @transform_2, window_bounds = array<i64: 128, 128>}, {pipeline_mode = #tpu.pipeline_mode<synchronous>, transform_indices = @transform_3, window_bounds = array<i64: 128, 128>}, {pipeline_mode = #tpu.pipeline_mode<synchronous>, transform_indices = @transform_4, window_bounds = array<i64: 128, 256>}, {pipeline_mode = #tpu.pipeline_mode<synchronous>, transform_indices = @transform_5, window_bounds = array<i64: 1, 640>}, {transform_indices = @transform_6, window_bounds = array<i64: 16, 256>}]} {
    %c0 = arith.constant 0 : index
    %c0_0 = arith.constant 0 : index
    %0 = vector.load %arg1[%c0, %c0_0] : memref<16x128xbf16, #tpu.memory_space<vmem>>, vector<16x128xbf16>
    %c0_1 = arith.constant 0 : index
    %c0_2 = arith.constant 0 : index
    %1 = vector.load %arg6[%c0_1, %c0_2] : memref<1x640xf32, #tpu.memory_space<vmem>>, vector<1x128xf32>
    %c0_3 = arith.constant 0 : index
    %c128 = arith.constant 128 : index
    %2 = vector.load %arg6[%c0_3, %c128] : memref<1x640xf32, #tpu.memory_space<vmem>>, vector<1x128xf32>
    %c0_4 = arith.constant 0 : index
    %c256 = arith.constant 256 : index
    %3 = vector.load %arg6[%c0_4, %c256] : memref<1x640xf32, #tpu.memory_space<vmem>>, vector<1x128xf32>
    %c0_5 = arith.constant 0 : index
    %c384 = arith.constant 384 : index
    %4 = vector.load %arg6[%c0_5, %c384] : memref<1x640xf32, #tpu.memory_space<vmem>>, vector<1x256xf32>
    %c0_6 = arith.constant 0 : index
    %c0_7 = arith.constant 0 : index
    %5 = vector.load %arg2[%c0_6, %c0_7] : memref<128x128xbf16, #tpu.memory_space<vmem>>, vector<128x128xbf16>
    %cst = arith.constant dense<0.000000e+00> : vector<16x128xf32>
    %6 = tpu.matmul %0, %5, %cst {dimension_numbers = #tpu.dot_dimension_numbers<[1], [0], [0], [1], [0, 0, 1, 1], [], []>} : vector<16x128xbf16>, vector<128x128xbf16>, vector<16x128xf32> -> vector<16x128xf32>
    %7 = vector.broadcast %1 : vector<1x128xf32> to vector<16x128xf32>
    %8 = arith.addf %6, %7 : vector<16x128xf32>
    %cst_8 = arith.constant 0.000000e+00 : f32
    %9 = vector.broadcast %cst_8 : f32 to vector<16x128xf32>
    %10 = arith.maximumf %8, %9 : vector<16x128xf32>
    %11 = arith.truncf %10 : vector<16x128xf32> to vector<16x128xbf16>
    %c0_9 = arith.constant 0 : index
    %c0_10 = arith.constant 0 : index
    %12 = vector.load %arg3[%c0_9, %c0_10] : memref<128x128xbf16, #tpu.memory_space<vmem>>, vector<128x128xbf16>
    %cst_11 = arith.constant dense<0.000000e+00> : vector<16x128xf32>
    %13 = tpu.matmul %11, %12, %cst_11 {dimension_numbers = #tpu.dot_dimension_numbers<[1], [0], [0], [1], [0, 0, 1, 1], [], []>} : vector<16x128xbf16>, vector<128x128xbf16>, vector<16x128xf32> -> vector<16x128xf32>
    %14 = vector.broadcast %2 : vector<1x128xf32> to vector<16x128xf32>
    %15 = arith.addf %13, %14 : vector<16x128xf32>
    %16 = arith.addf %15, %10 : vector<16x128xf32>
    %cst_12 = arith.constant 0.000000e+00 : f32
    %17 = vector.broadcast %cst_12 : f32 to vector<16x128xf32>
    %18 = arith.maximumf %16, %17 : vector<16x128xf32>
    %19 = arith.truncf %18 : vector<16x128xf32> to vector<16x128xbf16>
    %c0_13 = arith.constant 0 : index
    %c0_14 = arith.constant 0 : index
    %20 = vector.load %arg4[%c0_13, %c0_14] : memref<128x128xbf16, #tpu.memory_space<vmem>>, vector<128x128xbf16>
    %cst_15 = arith.constant dense<0.000000e+00> : vector<16x128xf32>
    %21 = tpu.matmul %19, %20, %cst_15 {dimension_numbers = #tpu.dot_dimension_numbers<[1], [0], [0], [1], [0, 0, 1, 1], [], []>} : vector<16x128xbf16>, vector<128x128xbf16>, vector<16x128xf32> -> vector<16x128xf32>
    %22 = vector.broadcast %3 : vector<1x128xf32> to vector<16x128xf32>
    %23 = arith.addf %21, %22 : vector<16x128xf32>
    %24 = arith.addf %23, %18 : vector<16x128xf32>
    %cst_16 = arith.constant 0.000000e+00 : f32
    %25 = vector.broadcast %cst_16 : f32 to vector<16x128xf32>
    %26 = arith.maximumf %24, %25 : vector<16x128xf32>
    %27 = arith.truncf %26 : vector<16x128xf32> to vector<16x128xbf16>
    %c0_17 = arith.constant 0 : index
    %c0_18 = arith.constant 0 : index
    %28 = vector.load %arg5[%c0_17, %c0_18] : memref<128x256xbf16, #tpu.memory_space<vmem>>, vector<128x256xbf16>
    %cst_19 = arith.constant dense<0.000000e+00> : vector<16x256xf32>
    %29 = tpu.matmul %27, %28, %cst_19 {dimension_numbers = #tpu.dot_dimension_numbers<[1], [0], [0], [1], [0, 0, 1, 1], [], []>} : vector<16x128xbf16>, vector<128x256xbf16>, vector<16x256xf32> -> vector<16x256xf32>
    %30 = vector.broadcast %4 : vector<1x256xf32> to vector<16x256xf32>
    %31 = arith.addf %29, %30 : vector<16x256xf32>
    %c0_20 = arith.constant 0 : index
    %c0_21 = arith.constant 0 : index
    %32 = vector.load %arg7[%c0_20, %c0_21] : memref<16x256xf32, #tpu.memory_space<vmem>>, vector<16x256xf32>
    tpu.vector_store %arg7[%c0_20, %c0_21], %31 {strides = array<i32>} : memref<16x256xf32, #tpu.memory_space<vmem>>, vector<16x256xf32>,
    return
  }
  func.func @transform_0(%arg0: i32) -> (i32, i32) {
    %c0_i32 = arith.constant 0 : i32
    %c0_i32_0 = arith.constant 0 : i32
    return %arg0, %c0_i32 : i32, i32
  }
  func.func @transform_1(%arg0: i32) -> (i32, i32) {
    %c0_i32 = arith.constant 0 : i32
    %c0_i32_0 = arith.constant 0 : i32
    %c0_i32_1 = arith.constant 0 : i32
    return %c0_i32, %c0_i32_0 : i32, i32
  }
  func.func @transform_2(%arg0: i32) -> (i32, i32) {
    %c0_i32 = arith.constant 0 : i32
    %c0_i32_0 = arith.constant 0 : i32
    %c0_i32_1 = arith.constant 0 : i32
    return %c0_i32, %c0_i32_0 : i32, i32
  }
  func.func @transform_3(%arg0: i32) -> (i32, i32) {
    %c0_i32 = arith.constant 0 : i32
    %c0_i32_0 = arith.constant 0 : i32
    %c0_i32_1 = arith.constant 0 : i32
    return %c0_i32, %c0_i32_0 : i32, i32
  }
  func.func @transform_4(%arg0: i32) -> (i32, i32) {
    %c0_i32 = arith.constant 0 : i32
    %c0_i32_0 = arith.constant 0 : i32
    %c0_i32_1 = arith.constant 0 : i32
    return %c0_i32, %c0_i32_0 : i32, i32
  }
  func.func @transform_5(%arg0: i32) -> (i32, i32) {
    %c0_i32 = arith.constant 0 : i32
    %c0_i32_0 = arith.constant 0 : i32
    %c0_i32_1 = arith.constant 0 : i32
    return %c0_i32, %c0_i32_0 : i32, i32
  }
  func.func @transform_6(%arg0: i32) -> (i32, i32) {
    %c0_i32 = arith.constant 0 : i32
    %c0_i32_0 = arith.constant 0 : i32
    return %arg0, %c0_i32 : i32, i32
  }
}

module attributes {stable_mosaic.version = 11 : i64} {
  func.func @_encoder_kernel_resident(%arg0: i32, %arg1: memref<16x128xbf16, #tpu.memory_space<vmem>>, %arg2: memref<128x128xbf16, #tpu.memory_space<vmem>>, %arg3: memref<128x128xbf16, #tpu.memory_space<vmem>>, %arg4: memref<128x128xbf16, #tpu.memory_space<vmem>>, %arg5: memref<128x256xbf16, #tpu.memory_space<vmem>>, %arg6: memref<1x640xf32, #tpu.memory_space<vmem>>, %arg7: memref<16x256xf32, #tpu.memory_space<vmem>>) attributes {dimension_semantics = [#tpu.dimension_semantics<parallel>], iteration_bounds = array<i64: 1>, scalar_prefetch = 0 : i64, scratch_operands = 0 : i64, tpu.core_type = #tpu.core_type<tc>, window_params = [{transform_indices = @transform_0, window_bounds = array<i64: 16, 128>}, {pipeline_mode = #tpu.pipeline_mode<synchronous>, transform_indices = @transform_1, window_bounds = array<i64: 128, 128>}, {pipeline_mode = #tpu.pipeline_mode<synchronous>, transform_indices = @transform_2, window_bounds = array<i64: 128, 128>}, {pipeline_mode = #tpu.pipeline_mode<synchronous>, transform_indices = @transform_3, window_bounds = array<i64: 128, 128>}, {pipeline_mode = #tpu.pipeline_mode<synchronous>, transform_indices = @transform_4, window_bounds = array<i64: 128, 256>}, {pipeline_mode = #tpu.pipeline_mode<synchronous>, transform_indices = @transform_5, window_bounds = array<i64: 1, 640>}, {transform_indices = @transform_6, window_bounds = array<i64: 16, 256>}]} {
    %c0 = arith.constant 0 : index
    %c0_0 = arith.constant 0 : index
    %0 = vector.load %arg1[%c0, %c0_0] : memref<16x128xbf16, #tpu.memory_space<vmem>>, vector<16x128xbf16>
    %c0_1 = arith.constant 0 : index
    %c0_2 = arith.constant 0 : index
    %1 = vector.load %arg6[%c0_1, %c0_2] : memref<1x640xf32, #tpu.memory_space<vmem>>, vector<1x128xf32>
    %c0_3 = arith.constant 0 : index
    %c128 = arith.constant 128 : index
    %2 = vector.load %arg6[%c0_3, %c128] : memref<1x640xf32, #tpu.memory_space<vmem>>, vector<1x128xf32>
    %c0_4 = arith.constant 0 : index
    %c256 = arith.constant 256 : index
    %3 = vector.load %arg6[%c0_4, %c256] : memref<1x640xf32, #tpu.memory_space<vmem>>, vector<1x128xf32>
    %c0_5 = arith.constant 0 : index
    %c384 = arith.constant 384 : index
    %4 = vector.load %arg6[%c0_5, %c384] : memref<1x640xf32, #tpu.memory_space<vmem>>, vector<1x256xf32>
    %c0_6 = arith.constant 0 : index
    %c0_7 = arith.constant 0 : index
    %5 = vector.load %arg2[%c0_6, %c0_7] : memref<128x128xbf16, #tpu.memory_space<vmem>>, vector<128x128xbf16>
    %cst = arith.constant dense<0.000000e+00> : vector<16x128xf32>
    %6 = tpu.matmul %0, %5, %cst {dimension_numbers = #tpu.dot_dimension_numbers<[1], [0], [0], [1], [0, 0, 1, 1], [], []>} : vector<16x128xbf16>, vector<128x128xbf16>, vector<16x128xf32> -> vector<16x128xf32>
    %7 = vector.broadcast %1 : vector<1x128xf32> to vector<16x128xf32>
    %8 = arith.addf %6, %7 : vector<16x128xf32>
    %cst_8 = arith.constant 0.000000e+00 : f32
    %9 = vector.broadcast %cst_8 : f32 to vector<16x128xf32>
    %10 = arith.maximumf %8, %9 : vector<16x128xf32>
    %11 = arith.truncf %10 : vector<16x128xf32> to vector<16x128xbf16>
    %c0_9 = arith.constant 0 : index
    %c0_10 = arith.constant 0 : index
    %12 = vector.load %arg3[%c0_9, %c0_10] : memref<128x128xbf16, #tpu.memory_space<vmem>>, vector<128x128xbf16>
    %cst_11 = arith.constant dense<0.000000e+00> : vector<16x128xf32>
    %13 = tpu.matmul %11, %12, %cst_11 {dimension_numbers = #tpu.dot_dimension_numbers<[1], [0], [0], [1], [0, 0, 1, 1], [], []>} : vector<16x128xbf16>, vector<128x128xbf16>, vector<16x128xf32> -> vector<16x128xf32>
    %14 = vector.broadcast %2 : vector<1x128xf32> to vector<16x128xf32>
    %15 = arith.addf %13, %14 : vector<16x128xf32>
    %16 = arith.addf %15, %10 : vector<16x128xf32>
    %cst_12 = arith.constant 0.000000e+00 : f32
    %17 = vector.broadcast %cst_12 : f32 to vector<16x128xf32>
    %18 = arith.maximumf %16, %17 : vector<16x128xf32>
    %19 = arith.truncf %18 : vector<16x128xf32> to vector<16x128xbf16>
    %c0_13 = arith.constant 0 : index
    %c0_14 = arith.constant 0 : index
    %20 = vector.load %arg4[%c0_13, %c0_14] : memref<128x128xbf16, #tpu.memory_space<vmem>>, vector<128x128xbf16>
    %cst_15 = arith.constant dense<0.000000e+00> : vector<16x128xf32>
    %21 = tpu.matmul %19, %20, %cst_15 {dimension_numbers = #tpu.dot_dimension_numbers<[1], [0], [0], [1], [0, 0, 1, 1], [], []>} : vector<16x128xbf16>, vector<128x128xbf16>, vector<16x128xf32> -> vector<16x128xf32>
    %22 = vector.broadcast %3 : vector<1x128xf32> to vector<16x128xf32>
    %23 = arith.addf %21, %22 : vector<16x128xf32>
    %24 = arith.addf %23, %18 : vector<16x128xf32>
    %cst_16 = arith.constant 0.000000e+00 : f32
    %25 = vector.broadcast %cst_16 : f32 to vector<16x128xf32>
    %26 = arith.maximumf %24, %25 : vector<16x128xf32>
    %27 = arith.truncf %26 : vector<16x128xf32> to vector<16x128xbf16>
    %c0_17 = arith.constant 0 : index
    %c0_18 = arith.constant 0 : index
    %28 = vector.load %arg5[%c0_17, %c0_18] : memref<128x256xbf16, #tpu.memory_space<vmem>>, vector<128x256xbf16>
    %cst_19 = arith.constant dense<0.000000e+00> : vector<16x256xf32>
    %29 = tpu.matmul %27, %28, %cst_19 {dimension_numbers = #tpu.dot_dimension_numbers<[1], [0], [0], [1], [0, 0, 1, 1], [], []>} : vector<16x128xbf16>, vector<128x256xbf16>, vector<16x256xf32> -> vector<16x256xf32>
    %30 = vector.broadcast %4 : vector<1x256xf32> to vector<16x256xf32>
    %31 = arith.addf %29, %30 : vector<16x256xf32>
    %c0_20 = arith.constant 0 : index
    %c0_21 = arith.constant 0 : index
    %32 = vector.load %arg7[%c0_20, %c0_21] : memref<16x256xf32, #tpu.memory_space<vmem>>, vector<16x256xf32>
    tpu.vector_store %arg7[%c0_20, %c0_21], %31 {strides = array<i32>} : memref<16x256xf32, #tpu.memory_space<vmem>>, vector<16x256xf32>,
    return
  }
  func.func @transform_0(%arg0: i32) -> (i32, i32) {
    %c0_i32 = arith.constant 0 : i32
    %c0_i32_0 = arith.constant 0 : i32
    return %arg0, %c0_i32 : i32, i32
  }
  func.func @transform_1(%arg0: i32) -> (i32, i32) {
    %c0_i32 = arith.constant 0 : i32
    %c0_i32_0 = arith.constant 0 : i32
    %c0_i32_1 = arith.constant 0 : i32
    return %c0_i32, %c0_i32_0 : i32, i32
  }
  func.func @transform_2(%arg0: i32) -> (i32, i32) {
    %c0_i32 = arith.constant 0 : i32
    %c0_i32_0 = arith.constant 0 : i32
    %c0_i32_1 = arith.constant 0 : i32
    return %c0_i32, %c0_i32_0 : i32, i32
  }
  func.func @transform_3(%arg0: i32) -> (i32, i32) {
    %c0_i32 = arith.constant 0 : i32
    %c0_i32_0 = arith.constant 0 : i32
    %c0_i32_1 = arith.constant 0 : i32
    return %c0_i32, %c0_i32_0 : i32, i32
  }
  func.func @transform_4(%arg0: i32) -> (i32, i32) {
    %c0_i32 = arith.constant 0 : i32
    %c0_i32_0 = arith.constant 0 : i32
    %c0_i32_1 = arith.constant 0 : i32
    return %c0_i32, %c0_i32_0 : i32, i32
  }
  func.func @transform_5(%arg0: i32) -> (i32, i32) {
    %c0_i32 = arith.constant 0 : i32
    %c0_i32_0 = arith.constant 0 : i32
    %c0_i32_1 = arith.constant 0 : i32
    return %c0_i32, %c0_i32_0 : i32, i32
  }
  func.func @transform_6(%arg0: i32) -> (i32, i32) {
    %c0_i32 = arith.constant 0 : i32
    %c0_i32_0 = arith.constant 0 : i32
    return %arg0, %c0_i32 : i32, i32
  }
}

</mosaic_0001>

<llo_original>
// kernel: _forward_impl.1
$region0: #{_forward_impl.1}
  #allocation0 [shape = 'u32[]', space=smem, size = 0x4, offset = 0x4, fixed_abs, tag = 'smem constant byte address 0x4 - core index']
  #allocation1 [shape = 'u32[144,128]{1,0:T(1,128)}', space=vmem, size = 0x12000, scoped, tag = 'internal scratch']
  %s0 = inlined_call_operand.vmem [shape: bf16[16,128], index: 0, kind: input, shape index: {}]
  %s1 = inlined_call_operand.hbm [shape: bf16[128,128], index: 1, kind: input, shape index: {}]
  %s2 = inlined_call_operand.hbm [shape: bf16[128,128], index: 2, kind: input, shape index: {}]
  %s3 = inlined_call_operand.hbm [shape: bf16[128,128], index: 3, kind: input, shape index: {}]
  %s4 = inlined_call_operand.hbm [shape: bf16[128,256], index: 4, kind: input, shape index: {}]
  %s5 = inlined_call_operand.vmem [shape: f32[1,640], index: 5, kind: input, shape index: {}]
  %s6 = inlined_call_operand.vmem [shape: f32[16,256], index: 6, kind: output, shape index: {}]
  %s7 = sld [smem:[#allocation0]]
  $region50: #{_forward_impl.1} parent=0
    _
  %s9 = ssub.s32 1, %s7
  %s10 = scalar_select 0, %s9, %s7
  $region1: #{_forward_impl.1} parent=0
    #allocation2 [shape = 'u8[32768]{0}', space=vmem, size = 0x8000, scoped, tag = 'input window, operand 1, single buffered']
    #allocation3 [shape = 's32[1]{0}', space=sflag, size = 0x4, scoped, tag = 'scoped memory for _forward_impl.1']
    #allocation4 [shape = 'u8[32768]{0}', space=vmem, size = 0x8000, scoped, tag = 'input window, operand 2, single buffered']
    #allocation5 [shape = 's32[1]{0}', space=sflag, size = 0x4, scoped, tag = 'scoped memory for _forward_impl.1']
    #allocation6 [shape = 'u8[32768]{0}', space=vmem, size = 0x8000, scoped, tag = 'input window, operand 3, single buffered']
    #allocation7 [shape = 'u8[65536]{0}', space=vmem, size = 0x10000, scoped, tag = 'input window, operand 4, single buffered']
    #allocation8 [shape = 's32[1]{0}', space=sflag, size = 0x4, scoped, tag = 'scoped memory for _forward_impl.1']
    %11 = vsyncpa [#allocation3], 0
    %12 = vsyncpa [#allocation5], 0
    %13 = vsyncpa [#allocation8], 0
    // Predicated region
    $region2: #{_forward_impl.1} parent=1 // pred_check
      _
    $region3: #{_forward_impl.1} parent=1 // pred_check_branch
      %15 = sbr.rel (0) target = $region5
    $region4: #{_forward_impl.1} parent=1 // pred_region
      _
    $region5: #{_forward_impl.1} parent=1 // pred_fallthru
      _
    // Predicated region
    $region6: #{_forward_impl.1} parent=1 // pred_check
      _
    $region7: #{_forward_impl.1} parent=1 // pred_check_branch
      %17 = sbr.rel (0) target = $region9
    $region8: #{_forward_impl.1} parent=1 // pred_region
      %s19 = ssub.s32 1024, 1024
      %20 = vsyncadd [#allocation3], %s19
      %s21 = sshll.u32 [#allocation2], 4
      %s22 = int_to_ptr.vmem [resolvable:$true] %s21
      %27 = dma.hbm_to_vmem [thread:$0]  %s1, 1024, %s22, [#allocation3], 64, 64, 4
    $region9: #{_forward_impl.1} parent=1 // pred_fallthru
      _
    // Predicated region
    $region10: #{_forward_impl.1} parent=1 // pred_check
      _
    $region11: #{_forward_impl.1} parent=1 // pred_check_branch
      %29 = sbr.rel (0) target = $region13
    $region12: #{_forward_impl.1} parent=1 // pred_region
      %s31 = ssub.s32 1024, 1024
      %32 = vsyncadd [#allocation5], %s31
      %s33 = sshll.u32 [#allocation4], 4
      %s34 = int_to_ptr.vmem [resolvable:$true] %s33
      %39 = dma.hbm_to_vmem [thread:$0]  %s2, 1024, %s34, [#allocation5], 64, 64, 4
    $region13: #{_forward_impl.1} parent=1 // pred_fallthru
      _
    // Predicated region
    $region14: #{_forward_impl.1} parent=1 // pred_check
      _
    $region15: #{_forward_impl.1} parent=1 // pred_check_branch
      %41 = sbr.rel (0) target = $region17
    $region16: #{_forward_impl.1} parent=1 // pred_region
      %s43 = ssub.s32 1024, 1024
      %44 = vsyncadd [#allocation5], %s43
      %s45 = sshll.u32 [#allocation6], 4
      %s46 = int_to_ptr.vmem [resolvable:$true] %s45
      %51 = dma.hbm_to_vmem [thread:$0]  %s3, 1024, %s46, [#allocation5], 64, 64, 4
    $region17: #{_forward_impl.1} parent=1 // pred_fallthru
      _
    // Predicated region
    $region18: #{_forward_impl.1} parent=1 // pred_check
      _
    $region19: #{_forward_impl.1} parent=1 // pred_check_branch
      %53 = sbr.rel (0) target = $region21
    $region20: #{_forward_impl.1} parent=1 // pred_region
      %s55 = ssub.s32 2048, 2048
      %56 = vsyncadd [#allocation8], %s55
      %s57 = sshll.u32 [#allocation7], 4
      %s58 = int_to_ptr.vmem [resolvable:$true] %s57
      %63 = dma.hbm_to_vmem [thread:$0]  %s4, 2048, %s58, [#allocation8], 128, 128, 8
    $region21: #{_forward_impl.1} parent=1 // pred_fallthru
      _
    // Predicated region
    $region22: #{_forward_impl.1} parent=1 // pred_check
      _
    $region23: #{_forward_impl.1} parent=1 // pred_check_branch
      %65 = sbr.rel (0) target = $region25
    $region24: #{_forward_impl.1} parent=1 // pred_region
      _
    $region25: #{_forward_impl.1} parent=1 // pred_fallthru
      _
    // Predicated region
    $region26: #{_forward_impl.1} parent=1 // pred_check
      _
    $region27: #{_forward_impl.1} parent=1 // pred_check_branch
      %67 = sbr.rel (0) target = $region29
    $region28: #{_forward_impl.1} parent=1 // pred_region
      %68 = dma.done [#allocation3], 1024
    $region29: #{_forward_impl.1} parent=1 // pred_fallthru
      _
    // Predicated region
    $region30: #{_forward_impl.1} parent=1 // pred_check
      _
    $region31: #{_forward_impl.1} parent=1 // pred_check_branch
      %70 = sbr.rel (0) target = $region33
    $region32: #{_forward_impl.1} parent=1 // pred_region
      %71 = dma.done [#allocation5], 1024
    $region33: #{_forward_impl.1} parent=1 // pred_fallthru
      _
    // Predicated region
    $region34: #{_forward_impl.1} parent=1 // pred_check
      _
    $region35: #{_forward_impl.1} parent=1 // pred_check_branch
      %73 = sbr.rel (0) target = $region37
    $region36: #{_forward_impl.1} parent=1 // pred_region
      %74 = dma.done [#allocation5], 1024
    $region37: #{_forward_impl.1} parent=1 // pred_fallthru
      _
    // Predicated region
    $region38: #{_forward_impl.1} parent=1 // pred_check
      _
    $region39: #{_forward_impl.1} parent=1 // pred_check_branch
      %76 = sbr.rel (0) target = $region41
    $region40: #{_forward_impl.1} parent=1 // pred_region
      %77 = dma.done [#allocation8], 2048
    $region41: #{_forward_impl.1} parent=1 // pred_fallthru
      _
    %v79 = vld [vmem:[%s0] sm:$0xf]
    %v80 = vld [vmem:[%s0 + $0x4] sm:$0xf]
    %v81 = vld [vmem:[%s5] sm:$0x1]
    %v82 = vld [vmem:[%s5 + $0x1] sm:$0x1]
    %v83 = vld [vmem:[%s5 + $0x2] sm:$0x1]
    %v84 = vld [vmem:[%s5 + $0x3] sm:$0x3]
    %v85 = vld [vmem:[#allocation2] sm:$0xf]
    %v86 = vld [vmem:[#allocation2 + $0x4] sm:$0xf]
    %v87 = vld [vmem:[#allocation2 + $0x8] sm:$0xf]
    %v88 = vld [vmem:[#allocation2 + $0xc] sm:$0xf]
    %v89 = vld [vmem:[#allocation2 + $0x10] sm:$0xf]
    %v90 = vld [vmem:[#allocation2 + $0x14] sm:$0xf]
    %v91 = vld [vmem:[#allocation2 + $0x18] sm:$0xf]
    %v92 = vld [vmem:[#allocation2 + $0x1c] sm:$0xf]
    %v93 = vld [vmem:[#allocation2 + $0x20] sm:$0xf]
    %v94 = vld [vmem:[#allocation2 + $0x24] sm:$0xf]
    %v95 = vld [vmem:[#allocation2 + $0x28] sm:$0xf]
    %v96 = vld [vmem:[#allocation2 + $0x2c] sm:$0xf]
    %v97 = vld [vmem:[#allocation2 + $0x30] sm:$0xf]
    %v98 = vld [vmem:[#allocation2 + $0x34] sm:$0xf]
    %v99 = vld [vmem:[#allocation2 + $0x38] sm:$0xf]
    %v100 = vld [vmem:[#allocation2 + $0x3c] sm:$0xf]
    %v102 = vlaneseq
    %v103 = vshrl.u32 %v102, 7
    %v104 = vsub.s32 0, %v103
    %v105 = vrot.slane %v81, %v104
    %v109 = vunpack.c.l.b16 %v79
    %v110 = vunpack.c.l.b16 %v80
    %v111 = vpack.c.b16 %v110, %v109
    %v129 = vunpack.c.l.b16 %v85
    %v130 = vunpack.c.l.b16 %v86
    %v131 = vunpack.c.l.b16 %v87
    %v132 = vunpack.c.l.b16 %v88
    %v133 = vunpack.c.l.b16 %v89
    %v134 = vunpack.c.l.b16 %v90
    %v135 = vunpack.c.l.b16 %v91
    %v136 = vunpack.c.l.b16 %v92
    %v137 = vunpack.c.l.b16 %v93
    %v138 = vunpack.c.l.b16 %v94
    %v139 = vunpack.c.l.b16 %v95
    %v140 = vunpack.c.l.b16 %v96
    %v141 = vunpack.c.l.b16 %v97
    %v142 = vunpack.c.l.b16 %v98
    %v143 = vunpack.c.l.b16 %v99
    %v144 = vunpack.c.l.b16 %v100
    %v145 = vpack.c.b16 %v130, %v129
    %v146 = vpack.c.b16 %v132, %v131
    %v147 = vpack.c.b16 %v134, %v133
    %v148 = vpack.c.b16 %v136, %v135
    %v149 = vpack.c.b16 %v138, %v137
    %v150 = vpack.c.b16 %v140, %v139
    %v151 = vpack.c.b16 %v142, %v141
    %v152 = vpack.c.b16 %v144, %v143
    %161 = vmatprep.subr.bf16.mxu0 0
    %162 = vmatpush1.bf16.msra.mxu0 %v145
    %163 = vmatprep.subr.bf16.mxu0 0
    %164 = vmatpush1.bf16.msra.mxu0 %v146
    %165 = vmatprep.subr.bf16.mxu0 0
    %166 = vmatpush1.bf16.msra.mxu0 %v147
    %167 = vmatprep.subr.bf16.mxu0 0
    %168 = vmatpush1.bf16.msra.mxu0 %v148
    %169 = vmatprep.subr.bf16.mxu0 0
    %170 = vmatpush1.bf16.msra.mxu0 %v149
    %171 = vmatprep.subr.bf16.mxu0 0
    %172 = vmatpush1.bf16.msra.mxu0 %v150
    %173 = vmatprep.subr.bf16.mxu0 0
    %174 = vmatpush1.bf16.msra.mxu0 %v151
    %175 = vmatprep.subr.bf16.mxu0 0
    %176 = vmatpush1.bf16.msra.mxu0 %v152
    %177 = vmatprep.subr.bf16.mxu0 0
    %178 = vmatpush1.bf16.msra.mxu0 0
    %179 = vmatprep.subr.bf16.mxu0 0
    %180 = vmatpush1.bf16.msra.mxu0 0
    %181 = vmatprep.subr.bf16.mxu0 0
    %182 = vmatpush1.bf16.msra.mxu0 0
    %183 = vmatprep.subr.bf16.mxu0 0
    %184 = vmatpush1.bf16.msra.mxu0 0
    %185 = vmatprep.subr.bf16.mxu0 0
    %186 = vmatpush1.bf16.msra.mxu0 0
    %187 = vmatprep.subr.bf16.mxu0 0
    %188 = vmatpush1.bf16.msra.mxu0 0
    %189 = vmatprep.subr.bf16.mxu0 0
    %190 = vmatpush1.bf16.msra.mxu0 0
    %191 = vmatprep.subr.bf16.mxu0 0
    %192 = vmatpush1.bf16.msra.mxu0 0
    %193 = vmatprep.mubr.bf16.mxu0 0
    %194 = vmatmul.mubr.bf16.gmra.mrb[0].mxu0 %v111
    %v195 = vpop.f32.mrb[0].mxu0
    %v196 = vadd.f32 %v105, %v195
    %v197 = vpop.f32.mrb[0].mxu0
    %v198 = vpop.f32.mrb[0].mxu0
    %v199 = vadd.f32 %v105, %v198
    %v200 = vpop.f32.mrb[0].mxu0
    %201 = vdwg.mxu0
    %v202 = vmax.f32 %v196, 0.0
    %v203 = vmax.f32 %v199, 0.0
    %v204 = vpack.c.bf16 %v203, %v202
    %v205 = vld [vmem:[#allocation4] sm:$0xf]
    %v206 = vld [vmem:[#allocation4 + $0x4] sm:$0xf]
    %v207 = vld [vmem:[#allocation4 + $0x8] sm:$0xf]
    %v208 = vld [vmem:[#allocation4 + $0xc] sm:$0xf]
    %v209 = vld [vmem:[#allocation4 + $0x10] sm:$0xf]
    %v210 = vld [vmem:[#allocation4 + $0x14] sm:$0xf]
    %v211 = vld [vmem:[#allocation4 + $0x18] sm:$0xf]
    %v212 = vld [vmem:[#allocation4 + $0x1c] sm:$0xf]
    %v213 = vld [vmem:[#allocation4 + $0x20] sm:$0xf]
    %v214 = vld [vmem:[#allocation4 + $0x24] sm:$0xf]
    %v215 = vld [vmem:[#allocation4 + $0x28] sm:$0xf]
    %v216 = vld [vmem:[#allocation4 + $0x2c] sm:$0xf]
    %v217 = vld [vmem:[#allocation4 + $0x30] sm:$0xf]
    %v218 = vld [vmem:[#allocation4 + $0x34] sm:$0xf]
    %v219 = vld [vmem:[#allocation4 + $0x38] sm:$0xf]
    %v220 = vld [vmem:[#allocation4 + $0x3c] sm:$0xf]
    %v222 = vlaneseq
    %v223 = vshrl.u32 %v222, 7
    %v224 = vsub.s32 0, %v223
    %v225 = vrot.slane %v82, %v224
    %v243 = vunpack.c.l.b16 %v205
    %v244 = vunpack.c.l.b16 %v206
    %v245 = vunpack.c.l.b16 %v207
    %v246 = vunpack.c.l.b16 %v208
    %v247 = vunpack.c.l.b16 %v209
    %v248 = vunpack.c.l.b16 %v210
    %v249 = vunpack.c.l.b16 %v211
    %v250 = vunpack.c.l.b16 %v212
    %v251 = vunpack.c.l.b16 %v213
    %v252 = vunpack.c.l.b16 %v214
    %v253 = vunpack.c.l.b16 %v215
    %v254 = vunpack.c.l.b16 %v216
    %v255 = vunpack.c.l.b16 %v217
    %v256 = vunpack.c.l.b16 %v218
    %v257 = vunpack.c.l.b16 %v219
    %v258 = vunpack.c.l.b16 %v220
    %v259 = vpack.c.b16 %v244, %v243
    %v260 = vpack.c.b16 %v246, %v245
    %v261 = vpack.c.b16 %v248, %v247
    %v262 = vpack.c.b16 %v250, %v249
    %v263 = vpack.c.b16 %v252, %v251
    %v264 = vpack.c.b16 %v254, %v253
    %v265 = vpack.c.b16 %v256, %v255
    %v266 = vpack.c.b16 %v258, %v257
    %275 = vmatprep.subr.bf16.mxu0 0
    %276 = vmatpush1.bf16.msra.mxu0 %v259
    %277 = vmatprep.subr.bf16.mxu0 0
    %278 = vmatpush1.bf16.msra.mxu0 %v260
    %279 = vmatprep.subr.bf16.mxu0 0
    %280 = vmatpush1.bf16.msra.mxu0 %v261
    %281 = vmatprep.subr.bf16.mxu0 0
    %282 = vmatpush1.bf16.msra.mxu0 %v262
    %283 = vmatprep.subr.bf16.mxu0 0
    %284 = vmatpush1.bf16.msra.mxu0 %v263
    %285 = vmatprep.subr.bf16.mxu0 0
    %286 = vmatpush1.bf16.msra.mxu0 %v264
    %287 = vmatprep.subr.bf16.mxu0 0
    %288 = vmatpush1.bf16.msra.mxu0 %v265
    %289 = vmatprep.subr.bf16.mxu0 0
    %290 = vmatpush1.bf16.msra.mxu0 %v266
    %291 = vmatprep.subr.bf16.mxu0 0
    %292 = vmatpush1.bf16.msra.mxu0 0
    %293 = vmatprep.subr.bf16.mxu0 0
    %294 = vmatpush1.bf16.msra.mxu0 0
    %295 = vmatprep.subr.bf16.mxu0 0
    %296 = vmatpush1.bf16.msra.mxu0 0
    %297 = vmatprep.subr.bf16.mxu0 0
    %298 = vmatpush1.bf16.msra.mxu0 0
    %299 = vmatprep.subr.bf16.mxu0 0
    %300 = vmatpush1.bf16.msra.mxu0 0
    %301 = vmatprep.subr.bf16.mxu0 0
    %302 = vmatpush1.bf16.msra.mxu0 0
    %303 = vmatprep.subr.bf16.mxu0 0
    %304 = vmatpush1.bf16.msra.mxu0 0
    %305 = vmatprep.subr.bf16.mxu0 0
    %306 = vmatpush1.bf16.msra.mxu0 0
    %307 = vmatprep.mubr.bf16.mxu0 0
    %308 = vmatmul.mubr.bf16.gmra.mrb[0].mxu0 %v204
    %v309 = vpop.f32.mrb[0].mxu0
    %v310 = vadd.f32 %v225, %v309
    %v311 = vpop.f32.mrb[0].mxu0
    %v312 = vpop.f32.mrb[0].mxu0
    %v313 = vadd.f32 %v225, %v312
    %v314 = vpop.f32.mrb[0].mxu0
    %315 = vdwg.mxu0
    %v316 = vadd.f32 %v310, %v202
    %v317 = vadd.f32 %v313, %v203
    %v318 = vmax.f32 %v316, 0.0
    %v319 = vmax.f32 %v317, 0.0
    %v320 = vpack.c.bf16 %v319, %v318
    %v321 = vld [vmem:[#allocation6] sm:$0xf]
    %v322 = vld [vmem:[#allocation6 + $0x4] sm:$0xf]
    %v323 = vld [vmem:[#allocation6 + $0x8] sm:$0xf]
    %v324 = vld [vmem:[#allocation6 + $0xc] sm:$0xf]
    %v325 = vld [vmem:[#allocation6 + $0x10] sm:$0xf]
    %v326 = vld [vmem:[#allocation6 + $0x14] sm:$0xf]
    %v327 = vld [vmem:[#allocation6 + $0x18] sm:$0xf]
    %v328 = vld [vmem:[#allocation6 + $0x1c] sm:$0xf]
    %v329 = vld [vmem:[#allocation6 + $0x20] sm:$0xf]
    %v330 = vld [vmem:[#allocation6 + $0x24] sm:$0xf]
    %v331 = vld [vmem:[#allocation6 + $0x28] sm:$0xf]
    %v332 = vld [vmem:[#allocation6 + $0x2c] sm:$0xf]
    %v333 = vld [vmem:[#allocation6 + $0x30] sm:$0xf]
    %v334 = vld [vmem:[#allocation6 + $0x34] sm:$0xf]
    %v335 = vld [vmem:[#allocation6 + $0x38] sm:$0xf]
    %v336 = vld [vmem:[#allocation6 + $0x3c] sm:$0xf]
    %v338 = vlaneseq
    %v339 = vshrl.u32 %v338, 7
    %v340 = vsub.s32 0, %v339
    %v341 = vrot.slane %v83, %v340
    %v359 = vunpack.c.l.b16 %v321
    %v360 = vunpack.c.l.b16 %v322
    %v361 = vunpack.c.l.b16 %v323
    %v362 = vunpack.c.l.b16 %v324
    %v363 = vunpack.c.l.b16 %v325
    %v364 = vunpack.c.l.b16 %v326
    %v365 = vunpack.c.l.b16 %v327
    %v366 = vunpack.c.l.b16 %v328
    %v367 = vunpack.c.l.b16 %v329
    %v368 = vunpack.c.l.b16 %v330
    %v369 = vunpack.c.l.b16 %v331
    %v370 = vunpack.c.l.b16 %v332
    %v371 = vunpack.c.l.b16 %v333
    %v372 = vunpack.c.l.b16 %v334
    %v373 = vunpack.c.l.b16 %v335
    %v374 = vunpack.c.l.b16 %v336
    %v375 = vpack.c.b16 %v360, %v359
    %v376 = vpack.c.b16 %v362, %v361
    %v377 = vpack.c.b16 %v364, %v363
    %v378 = vpack.c.b16 %v366, %v365
    %v379 = vpack.c.b16 %v368, %v367
    %v380 = vpack.c.b16 %v370, %v369
    %v381 = vpack.c.b16 %v372, %v371
    %v382 = vpack.c.b16 %v374, %v373
    %391 = vmatprep.subr.bf16.mxu0 0
    %392 = vmatpush1.bf16.msra.mxu0 %v375
    %393 = vmatprep.subr.bf16.mxu0 0
    %394 = vmatpush1.bf16.msra.mxu0 %v376
    %395 = vmatprep.subr.bf16.mxu0 0
    %396 = vmatpush1.bf16.msra.mxu0 %v377
    %397 = vmatprep.subr.bf16.mxu0 0
    %398 = vmatpush1.bf16.msra.mxu0 %v378
    %399 = vmatprep.subr.bf16.mxu0 0
    %400 = vmatpush1.bf16.msra.mxu0 %v379
    %401 = vmatprep.subr.bf16.mxu0 0
    %402 = vmatpush1.bf16.msra.mxu0 %v380
    %403 = vmatprep.subr.bf16.mxu0 0
    %404 = vmatpush1.bf16.msra.mxu0 %v381
    %405 = vmatprep.subr.bf16.mxu0 0
    %406 = vmatpush1.bf16.msra.mxu0 %v382
    %407 = vmatprep.subr.bf16.mxu0 0
    %408 = vmatpush1.bf16.msra.mxu0 0
    %409 = vmatprep.subr.bf16.mxu0 0
    %410 = vmatpush1.bf16.msra.mxu0 0
    %411 = vmatprep.subr.bf16.mxu0 0
    %412 = vmatpush1.bf16.msra.mxu0 0
    %413 = vmatprep.subr.bf16.mxu0 0
    %414 = vmatpush1.bf16.msra.mxu0 0
    %415 = vmatprep.subr.bf16.mxu0 0
    %416 = vmatpush1.bf16.msra.mxu0 0
    %417 = vmatprep.subr.bf16.mxu0 0
    %418 = vmatpush1.bf16.msra.mxu0 0
    %419 = vmatprep.subr.bf16.mxu0 0
    %420 = vmatpush1.bf16.msra.mxu0 0
    %421 = vmatprep.subr.bf16.mxu0 0
    %422 = vmatpush1.bf16.msra.mxu0 0
    %423 = vmatprep.mubr.bf16.mxu0 0
    %424 = vmatmul.mubr.bf16.gmra.mrb[0].mxu0 %v320
    %v425 = vpop.f32.mrb[0].mxu0
    %v426 = vadd.f32 %v341, %v425
    %v427 = vpop.f32.mrb[0].mxu0
    %v428 = vpop.f32.mrb[0].mxu0
    %v429 = vadd.f32 %v341, %v428
    %v430 = vpop.f32.mrb[0].mxu0
    %431 = vdwg.mxu0
    %v432 = vadd.f32 %v426, %v318
    %v433 = vadd.f32 %v429, %v319
    %v434 = vmax.f32 %v432, 0.0
    %v435 = vmax.f32 %v433, 0.0
    %v436 = vpack.c.bf16 %v435, %v434
    %v437 = vld [vmem:[#allocation7] sm:$0xff]
    %v438 = vld [vmem:[#allocation7 + $0x8] sm:$0xff]
    %v439 = vld [vmem:[#allocation7 + $0x10] sm:$0xff]
    %v440 = vld [vmem:[#allocation7 + $0x18] sm:$0xff]
    %v441 = vld [vmem:[#allocation7 + $0x20] sm:$0xff]
    %v442 = vld [vmem:[#allocation7 + $0x28] sm:$0xff]
    %v443 = vld [vmem:[#allocation7 + $0x30] sm:$0xff]
    %v444 = vld [vmem:[#allocation7 + $0x38] sm:$0xff]
    %v445 = vld [vmem:[#allocation7 + $0x40] sm:$0xff]
    %v446 = vld [vmem:[#allocation7 + $0x48] sm:$0xff]
    %v447 = vld [vmem:[#allocation7 + $0x50] sm:$0xff]
    %v448 = vld [vmem:[#allocation7 + $0x58] sm:$0xff]
    %v449 = vld [vmem:[#allocation7 + $0x60] sm:$0xff]
    %v450 = vld [vmem:[#allocation7 + $0x68] sm:$0xff]
    %v451 = vld [vmem:[#allocation7 + $0x70] sm:$0xff]
    %v452 = vld [vmem:[#allocation7 + $0x78] sm:$0xff]
    %v454 = vlaneseq
    %v455 = vshrl.u32 %v454, 7
    %v456 = vsub.s32 0, %v455
    %v457 = vrot.slane %v84, %v456
    %v458 = vlaneseq
    %v459 = vshrl.u32 %v458, 7
    %v460 = vsub.s32 1, %v459
    %v461 = vrot.slane %v84, %v460
    %v480 = vunpack.c.l.b16 %v437
    %v481 = vunpack.c.h.b16 %v437
    %v482 = vunpack.c.l.b16 %v438
    %v483 = vunpack.c.h.b16 %v438
    %v484 = vunpack.c.l.b16 %v439
    %v485 = vunpack.c.h.b16 %v439
    %v486 = vunpack.c.l.b16 %v440
    %v487 = vunpack.c.h.b16 %v440
    %v488 = vunpack.c.l.b16 %v441
    %v489 = vunpack.c.h.b16 %v441
    %v490 = vunpack.c.l.b16 %v442
    %v491 = vunpack.c.h.b16 %v442
    %v492 = vunpack.c.l.b16 %v443
    %v493 = vunpack.c.h.b16 %v443
    %v494 = vunpack.c.l.b16 %v444
    %v495 = vunpack.c.h.b16 %v444
    %v496 = vunpack.c.l.b16 %v445
    %v497 = vunpack.c.h.b16 %v445
    %v498 = vunpack.c.l.b16 %v446
    %v499 = vunpack.c.h.b16 %v446
    %v500 = vunpack.c.l.b16 %v447
    %v501 = vunpack.c.h.b16 %v447
    %v502 = vunpack.c.l.b16 %v448
    %v503 = vunpack.c.h.b16 %v448
    %v504 = vunpack.c.l.b16 %v449
    %v505 = vunpack.c.h.b16 %v449
    %v506 = vunpack.c.l.b16 %v450
    %v507 = vunpack.c.h.b16 %v450
    %v508 = vunpack.c.l.b16 %v451
    %v509 = vunpack.c.h.b16 %v451
    %v510 = vunpack.c.l.b16 %v452
    %v511 = vunpack.c.h.b16 %v452
    %v512 = vpack.c.b16 %v482, %v480
    %v513 = vpack.c.b16 %v483, %v481
    %v514 = vpack.c.b16 %v486, %v484
    %v515 = vpack.c.b16 %v487, %v485
    %v516 = vpack.c.b16 %v490, %v488
    %v517 = vpack.c.b16 %v491, %v489
    %v518 = vpack.c.b16 %v494, %v492
    %v519 = vpack.c.b16 %v495, %v493
    %v520 = vpack.c.b16 %v498, %v496
    %v521 = vpack.c.b16 %v499, %v497
    %v522 = vpack.c.b16 %v502, %v500
    %v523 = vpack.c.b16 %v503, %v501
    %v524 = vpack.c.b16 %v506, %v504
    %v525 = vpack.c.b16 %v507, %v505
    %v526 = vpack.c.b16 %v510, %v508
    %v527 = vpack.c.b16 %v511, %v509
    %544 = vmatprep.subr.bf16.mxu0 %v513
    %545 = vmatpush1.bf16.msra.mxu0 %v512
    %546 = vmatprep.subr.bf16.mxu0 %v515
    %547 = vmatpush1.bf16.msra.mxu0 %v514
    %548 = vmatprep.subr.bf16.mxu0 %v517
    %549 = vmatpush1.bf16.msra.mxu0 %v516
    %550 = vmatprep.subr.bf16.mxu0 %v519
    %551 = vmatpush1.bf16.msra.mxu0 %v518
    %552 = vmatprep.subr.bf16.mxu0 %v521
    %553 = vmatpush1.bf16.msra.mxu0 %v520
    %554 = vmatprep.subr.bf16.mxu0 %v523
    %555 = vmatpush1.bf16.msra.mxu0 %v522
    %556 = vmatprep.subr.bf16.mxu0 %v525
    %557 = vmatpush1.bf16.msra.mxu0 %v524
    %558 = vmatprep.subr.bf16.mxu0 %v527
    %559 = vmatpush1.bf16.msra.mxu0 %v526
    %560 = vmatprep.subr.bf16.mxu0 0
    %561 = vmatpush1.bf16.msra.mxu0 0
    %562 = vmatprep.subr.bf16.mxu0 0
    %563 = vmatpush1.bf16.msra.mxu0 0
    %564 = vmatprep.subr.bf16.mxu0 0
    %565 = vmatpush1.bf16.msra.mxu0 0
    %566 = vmatprep.subr.bf16.mxu0 0
    %567 = vmatpush1.bf16.msra.mxu0 0
    %568 = vmatprep.subr.bf16.mxu0 0
    %569 = vmatpush1.bf16.msra.mxu0 0
    %570 = vmatprep.subr.bf16.mxu0 0
    %571 = vmatpush1.bf16.msra.mxu0 0
    %572 = vmatprep.subr.bf16.mxu0 0
    %573 = vmatpush1.bf16.msra.mxu0 0
    %574 = vmatprep.subr.bf16.mxu0 0
    %575 = vmatpush1.bf16.msra.mxu0 0
    %576 = vmatprep.mubr.bf16.mxu0 0
    %577 = vmatmul.mubr.bf16.gmra.mrb[0].mxu0 %v436
    %v578 = vpop.f32.mrb[0].mxu0
    %v579 = vadd.f32 %v457, %v578
    %v580 = vpop.f32.mrb[0].mxu0
    %v581 = vadd.f32 %v461, %v580
    %v582 = vpop.f32.mrb[0].mxu0
    %v583 = vadd.f32 %v457, %v582
    %v584 = vpop.f32.mrb[0].mxu0
    %v585 = vadd.f32 %v461, %v584
    %586 = vdwg.mxu0
    %587 = vst [vmem:[%s6] sm:$0xff] %v579
    %588 = vst [vmem:[%s6 + $0x8] sm:$0xff] %v581
    %589 = vst [vmem:[%s6 + $0x10] sm:$0xff] %v583
    %590 = vst [vmem:[%s6 + $0x18] sm:$0xff] %v585
    // Predicated region
    $region42: #{_forward_impl.1} parent=1 // pred_check
      _
    $region43: #{_forward_impl.1} parent=1 // pred_check_branch
      %592 = sbr.rel (0) target = $region45
    $region44: #{_forward_impl.1} parent=1 // pred_region
      _
    $region45: #{_forward_impl.1} parent=1 // pred_fallthru
      _
    // Predicated region
    $region46: #{_forward_impl.1} parent=1 // pred_check
      _
    $region47: #{_forward_impl.1} parent=1 // pred_check_branch
      %594 = sbr.rel (0) target = $region49
    $region48: #{_forward_impl.1} parent=1 // pred_region
      _
    $region49: #{_forward_impl.1} parent=1 // pred_fallthru
      _
    %595 = vsyncpa [#allocation3], 1
    %596 = vsyncpa [#allocation5], 1
    %597 = vsyncpa [#allocation8], 1

// kernel: _forward_impl.1
$region0: #{_forward_impl.1}
  #allocation0 [shape = 'u32[]', space=smem, size = 0x4, offset = 0x4, fixed_abs, tag = 'smem constant byte address 0x4 - core index']
  #allocation1 [shape = 'u32[144,128]{1,0:T(1,128)}', space=vmem, size = 0x12000, scoped, tag = 'internal scratch']
  %s0 = inlined_call_operand.vmem [shape: bf16[16,128], index: 0, kind: input, shape index: {}]
  %s1 = inlined_call_operand.hbm [shape: bf16[128,128], index: 1, kind: input, shape index: {}]
  %s2 = inlined_call_operand.hbm [shape: bf16[128,128], index: 2, kind: input, shape index: {}]
  %s3 = inlined_call_operand.hbm [shape: bf16[128,128], index: 3, kind: input, shape index: {}]
  %s4 = inlined_call_operand.hbm [shape: bf16[128,256], index: 4, kind: input, shape index: {}]
  %s5 = inlined_call_operand.vmem [shape: f32[1,640], index: 5, kind: input, shape index: {}]
  %s6 = inlined_call_operand.vmem [shape: f32[16,256], index: 6, kind: output, shape index: {}]
  %s7 = sld [smem:[#allocation0]]
  $region50: #{_forward_impl.1} parent=0
    _
  %s9 = ssub.s32 1, %s7
  %s10 = scalar_select 0, %s9, %s7
  $region1: #{_forward_impl.1} parent=0
    #allocation2 [shape = 'u8[32768]{0}', space=vmem, size = 0x8000, scoped, tag = 'input window, operand 1, single buffered']
    #allocation3 [shape = 's32[1]{0}', space=sflag, size = 0x4, scoped, tag = 'scoped memory for _forward_impl.1']
    #allocation4 [shape = 'u8[32768]{0}', space=vmem, size = 0x8000, scoped, tag = 'input window, operand 2, single buffered']
    #allocation5 [shape = 's32[1]{0}', space=sflag, size = 0x4, scoped, tag = 'scoped memory for _forward_impl.1']
    #allocation6 [shape = 'u8[32768]{0}', space=vmem, size = 0x8000, scoped, tag = 'input window, operand 3, single buffered']
    #allocation7 [shape = 'u8[65536]{0}', space=vmem, size = 0x10000, scoped, tag = 'input window, operand 4, single buffered']
    #allocation8 [shape = 's32[1]{0}', space=sflag, size = 0x4, scoped, tag = 'scoped memory for _forward_impl.1']
    %11 = vsyncpa [#allocation3], 0
    %12 = vsyncpa [#allocation5], 0
    %13 = vsyncpa [#allocation8], 0
    // Predicated region
    $region2: #{_forward_impl.1} parent=1 // pred_check
      _
    $region3: #{_forward_impl.1} parent=1 // pred_check_branch
      %15 = sbr.rel (0) target = $region5
    $region4: #{_forward_impl.1} parent=1 // pred_region
      _
    $region5: #{_forward_impl.1} parent=1 // pred_fallthru
      _
    // Predicated region
    $region6: #{_forward_impl.1} parent=1 // pred_check
      _
    $region7: #{_forward_impl.1} parent=1 // pred_check_branch
      %17 = sbr.rel (0) target = $region9
    $region8: #{_forward_impl.1} parent=1 // pred_region
      %s19 = ssub.s32 1024, 1024
      %20 = vsyncadd [#allocation3], %s19
      %s21 = sshll.u32 [#allocation2], 4
      %s22 = int_to_ptr.vmem [resolvable:$true] %s21
      %27 = dma.hbm_to_vmem [thread:$0]  %s1, 1024, %s22, [#allocation3], 64, 64, 4
    $region9: #{_forward_impl.1} parent=1 // pred_fallthru
      _
    // Predicated region
    $region10: #{_forward_impl.1} parent=1 // pred_check
      _
    $region11: #{_forward_impl.1} parent=1 // pred_check_branch
      %29 = sbr.rel (0) target = $region13
    $region12: #{_forward_impl.1} parent=1 // pred_region
      %s31 = ssub.s32 1024, 1024
      %32 = vsyncadd [#allocation5], %s31
      %s33 = sshll.u32 [#allocation4], 4
      %s34 = int_to_ptr.vmem [resolvable:$true] %s33
      %39 = dma.hbm_to_vmem [thread:$0]  %s2, 1024, %s34, [#allocation5], 64, 64, 4
    $region13: #{_forward_impl.1} parent=1 // pred_fallthru
      _
    // Predicated region
    $region14: #{_forward_impl.1} parent=1 // pred_check
      _
    $region15: #{_forward_impl.1} parent=1 // pred_check_branch
      %41 = sbr.rel (0) target = $region17
    $region16: #{_forward_impl.1} parent=1 // pred_region
      %s43 = ssub.s32 1024, 1024
      %44 = vsyncadd [#allocation5], %s43
      %s45 = sshll.u32 [#allocation6], 4
      %s46 = int_to_ptr.vmem [resolvable:$true] %s45
      %51 = dma.hbm_to_vmem [thread:$0]  %s3, 1024, %s46, [#allocation5], 64, 64, 4
    $region17: #{_forward_impl.1} parent=1 // pred_fallthru
      _
    // Predicated region
    $region18: #{_forward_impl.1} parent=1 // pred_check
      _
    $region19: #{_forward_impl.1} parent=1 // pred_check_branch
      %53 = sbr.rel (0) target = $region21
    $region20: #{_forward_impl.1} parent=1 // pred_region
      %s55 = ssub.s32 2048, 2048
      %56 = vsyncadd [#allocation8], %s55
      %s57 = sshll.u32 [#allocation7], 4
      %s58 = int_to_ptr.vmem [resolvable:$true] %s57
      %63 = dma.hbm_to_vmem [thread:$0]  %s4, 2048, %s58, [#allocation8], 128, 128, 8
    $region21: #{_forward_impl.1} parent=1 // pred_fallthru
      _
    // Predicated region
    $region22: #{_forward_impl.1} parent=1 // pred_check
      _
    $region23: #{_forward_impl.1} parent=1 // pred_check_branch
      %65 = sbr.rel (0) target = $region25
    $region24: #{_forward_impl.1} parent=1 // pred_region
      _
    $region25: #{_forward_impl.1} parent=1 // pred_fallthru
      _
    // Predicated region
    $region26: #{_forward_impl.1} parent=1 // pred_check
      _
    $region27: #{_forward_impl.1} parent=1 // pred_check_branch
      %67 = sbr.rel (0) target = $region29
    $region28: #{_forward_impl.1} parent=1 // pred_region
      %68 = dma.done [#allocation3], 1024
    $region29: #{_forward_impl.1} parent=1 // pred_fallthru
      _
    // Predicated region
    $region30: #{_forward_impl.1} parent=1 // pred_check
      _
    $region31: #{_forward_impl.1} parent=1 // pred_check_branch
      %70 = sbr.rel (0) target = $region33
    $region32: #{_forward_impl.1} parent=1 // pred_region
      %71 = dma.done [#allocation5], 1024
    $region33: #{_forward_impl.1} parent=1 // pred_fallthru
      _
    // Predicated region
    $region34: #{_forward_impl.1} parent=1 // pred_check
      _
    $region35: #{_forward_impl.1} parent=1 // pred_check_branch
      %73 = sbr.rel (0) target = $region37
    $region36: #{_forward_impl.1} parent=1 // pred_region
      %74 = dma.done [#allocation5], 1024
    $region37: #{_forward_impl.1} parent=1 // pred_fallthru
      _
    // Predicated region
    $region38: #{_forward_impl.1} parent=1 // pred_check
      _
    $region39: #{_forward_impl.1} parent=1 // pred_check_branch
      %76 = sbr.rel (0) target = $region41
    $region40: #{_forward_impl.1} parent=1 // pred_region
      %77 = dma.done [#allocation8], 2048
    $region41: #{_forward_impl.1} parent=1 // pred_fallthru
      _
    %v79 = vld [vmem:[%s0] sm:$0xf]
    %v80 = vld [vmem:[%s0 + $0x4] sm:$0xf]
    %v81 = vld [vmem:[%s5] sm:$0x1]
    %v82 = vld [vmem:[%s5 + $0x1] sm:$0x1]
    %v83 = vld [vmem:[%s5 + $0x2] sm:$0x1]
    %v84 = vld [vmem:[%s5 + $0x3] sm:$0x3]
    %v85 = vld [vmem:[#allocation2] sm:$0xf]
    %v86 = vld [vmem:[#allocation2 + $0x4] sm:$0xf]
    %v87 = vld [vmem:[#allocation2 + $0x8] sm:$0xf]
    %v88 = vld [vmem:[#allocation2 + $0xc] sm:$0xf]
    %v89 = vld [vmem:[#allocation2 + $0x10] sm:$0xf]
    %v90 = vld [vmem:[#allocation2 + $0x14] sm:$0xf]
    %v91 = vld [vmem:[#allocation2 + $0x18] sm:$0xf]
    %v92 = vld [vmem:[#allocation2 + $0x1c] sm:$0xf]
    %v93 = vld [vmem:[#allocation2 + $0x20] sm:$0xf]
    %v94 = vld [vmem:[#allocation2 + $0x24] sm:$0xf]
    %v95 = vld [vmem:[#allocation2 + $0x28] sm:$0xf]
    %v96 = vld [vmem:[#allocation2 + $0x2c] sm:$0xf]
    %v97 = vld [vmem:[#allocation2 + $0x30] sm:$0xf]
    %v98 = vld [vmem:[#allocation2 + $0x34] sm:$0xf]
    %v99 = vld [vmem:[#allocation2 + $0x38] sm:$0xf]
    %v100 = vld [vmem:[#allocation2 + $0x3c] sm:$0xf]
    %v102 = vlaneseq
    %v103 = vshrl.u32 %v102, 7
    %v104 = vsub.s32 0, %v103
    %v105 = vrot.slane %v81, %v104
    %v109 = vunpack.c.l.b16 %v79
    %v110 = vunpack.c.l.b16 %v80
    %v111 = vpack.c.b16 %v110, %v109
    %v129 = vunpack.c.l.b16 %v85
    %v130 = vunpack.c.l.b16 %v86
    %v131 = vunpack.c.l.b16 %v87
    %v132 = vunpack.c.l.b16 %v88
    %v133 = vunpack.c.l.b16 %v89
    %v134 = vunpack.c.l.b16 %v90
    %v135 = vunpack.c.l.b16 %v91
    %v136 = vunpack.c.l.b16 %v92
    %v137 = vunpack.c.l.b16 %v93
    %v138 = vunpack.c.l.b16 %v94
    %v139 = vunpack.c.l.b16 %v95
    %v140 = vunpack.c.l.b16 %v96
    %v141 = vunpack.c.l.b16 %v97
    %v142 = vunpack.c.l.b16 %v98
    %v143 = vunpack.c.l.b16 %v99
    %v144 = vunpack.c.l.b16 %v100
    %v145 = vpack.c.b16 %v130, %v129
    %v146 = vpack.c.b16 %v132, %v131
    %v147 = vpack.c.b16 %v134, %v133
    %v148 = vpack.c.b16 %v136, %v135
    %v149 = vpack.c.b16 %v138, %v137
    %v150 = vpack.c.b16 %v140, %v139
    %v151 = vpack.c.b16 %v142, %v141
    %v152 = vpack.c.b16 %v144, %v143
    %161 = vmatprep.subr.bf16.mxu0 0
    %162 = vmatpush1.bf16.msra.mxu0 %v145
    %163 = vmatprep.subr.bf16.mxu0 0
    %164 = vmatpush1.bf16.msra.mxu0 %v146
    %165 = vmatprep.subr.bf16.mxu0 0
    %166 = vmatpush1.bf16.msra.mxu0 %v147
    %167 = vmatprep.subr.bf16.mxu0 0
    %168 = vmatpush1.bf16.msra.mxu0 %v148
    %169 = vmatprep.subr.bf16.mxu0 0
    %170 = vmatpush1.bf16.msra.mxu0 %v149
    %171 = vmatprep.subr.bf16.mxu0 0
    %172 = vmatpush1.bf16.msra.mxu0 %v150
    %173 = vmatprep.subr.bf16.mxu0 0
    %174 = vmatpush1.bf16.msra.mxu0 %v151
    %175 = vmatprep.subr.bf16.mxu0 0
    %176 = vmatpush1.bf16.msra.mxu0 %v152
    %177 = vmatprep.subr.bf16.mxu0 0
    %178 = vmatpush1.bf16.msra.mxu0 0
    %179 = vmatprep.subr.bf16.mxu0 0
    %180 = vmatpush1.bf16.msra.mxu0 0
    %181 = vmatprep.subr.bf16.mxu0 0
    %182 = vmatpush1.bf16.msra.mxu0 0
    %183 = vmatprep.subr.bf16.mxu0 0
    %184 = vmatpush1.bf16.msra.mxu0 0
    %185 = vmatprep.subr.bf16.mxu0 0
    %186 = vmatpush1.bf16.msra.mxu0 0
    %187 = vmatprep.subr.bf16.mxu0 0
    %188 = vmatpush1.bf16.msra.mxu0 0
    %189 = vmatprep.subr.bf16.mxu0 0
    %190 = vmatpush1.bf16.msra.mxu0 0
    %191 = vmatprep.subr.bf16.mxu0 0
    %192 = vmatpush1.bf16.msra.mxu0 0
    %193 = vmatprep.mubr.bf16.mxu0 0
    %194 = vmatmul.mubr.bf16.gmra.mrb[0].mxu0 %v111
    %v195 = vpop.f32.mrb[0].mxu0
    %v196 = vadd.f32 %v105, %v195
    %v197 = vpop.f32.mrb[0].mxu0
    %v198 = vpop.f32.mrb[0].mxu0
    %v199 = vadd.f32 %v105, %v198
    %v200 = vpop.f32.mrb[0].mxu0
    %201 = vdwg.mxu0
    %v202 = vmax.f32 %v196, 0.0
    %v203 = vmax.f32 %v199, 0.0
    %v204 = vpack.c.bf16 %v203, %v202
    %v205 = vld [vmem:[#allocation4] sm:$0xf]
    %v206 = vld [vmem:[#allocation4 + $0x4] sm:$0xf]
    %v207 = vld [vmem:[#allocation4 + $0x8] sm:$0xf]
    %v208 = vld [vmem:[#allocation4 + $0xc] sm:$0xf]
    %v209 = vld [vmem:[#allocation4 + $0x10] sm:$0xf]
    %v210 = vld [vmem:[#allocation4 + $0x14] sm:$0xf]
    %v211 = vld [vmem:[#allocation4 + $0x18] sm:$0xf]
    %v212 = vld [vmem:[#allocation4 + $0x1c] sm:$0xf]
    %v213 = vld [vmem:[#allocation4 + $0x20] sm:$0xf]
    %v214 = vld [vmem:[#allocation4 + $0x24] sm:$0xf]
    %v215 = vld [vmem:[#allocation4 + $0x28] sm:$0xf]
    %v216 = vld [vmem:[#allocation4 + $0x2c] sm:$0xf]
    %v217 = vld [vmem:[#allocation4 + $0x30] sm:$0xf]
    %v218 = vld [vmem:[#allocation4 + $0x34] sm:$0xf]
    %v219 = vld [vmem:[#allocation4 + $0x38] sm:$0xf]
    %v220 = vld [vmem:[#allocation4 + $0x3c] sm:$0xf]
    %v222 = vlaneseq
    %v223 = vshrl.u32 %v222, 7
    %v224 = vsub.s32 0, %v223
    %v225 = vrot.slane %v82, %v224
    %v243 = vunpack.c.l.b16 %v205
    %v244 = vunpack.c.l.b16 %v206
    %v245 = vunpack.c.l.b16 %v207
    %v246 = vunpack.c.l.b16 %v208
    %v247 = vunpack.c.l.b16 %v209
    %v248 = vunpack.c.l.b16 %v210
    %v249 = vunpack.c.l.b16 %v211
    %v250 = vunpack.c.l.b16 %v212
    %v251 = vunpack.c.l.b16 %v213
    %v252 = vunpack.c.l.b16 %v214
    %v253 = vunpack.c.l.b16 %v215
    %v254 = vunpack.c.l.b16 %v216
    %v255 = vunpack.c.l.b16 %v217
    %v256 = vunpack.c.l.b16 %v218
    %v257 = vunpack.c.l.b16 %v219
    %v258 = vunpack.c.l.b16 %v220
    %v259 = vpack.c.b16 %v244, %v243
    %v260 = vpack.c.b16 %v246, %v245
    %v261 = vpack.c.b16 %v248, %v247
    %v262 = vpack.c.b16 %v250, %v249
    %v263 = vpack.c.b16 %v252, %v251
    %v264 = vpack.c.b16 %v254, %v253
    %v265 = vpack.c.b16 %v256, %v255
    %v266 = vpack.c.b16 %v258, %v257
    %275 = vmatprep.subr.bf16.mxu0 0
    %276 = vmatpush1.bf16.msra.mxu0 %v259
    %277 = vmatprep.subr.bf16.mxu0 0
    %278 = vmatpush1.bf16.msra.mxu0 %v260
    %279 = vmatprep.subr.bf16.mxu0 0
    %280 = vmatpush1.bf16.msra.mxu0 %v261
    %281 = vmatprep.subr.bf16.mxu0 0
    %282 = vmatpush1.bf16.msra.mxu0 %v262
    %283 = vmatprep.subr.bf16.mxu0 0
    %284 = vmatpush1.bf16.msra.mxu0 %v263
    %285 = vmatprep.subr.bf16.mxu0 0
    %286 = vmatpush1.bf16.msra.mxu0 %v264
    %287 = vmatprep.subr.bf16.mxu0 0
    %288 = vmatpush1.bf16.msra.mxu0 %v265
    %289 = vmatprep.subr.bf16.mxu0 0
    %290 = vmatpush1.bf16.msra.mxu0 %v266
    %291 = vmatprep.subr.bf16.mxu0 0
    %292 = vmatpush1.bf16.msra.mxu0 0
    %293 = vmatprep.subr.bf16.mxu0 0
    %294 = vmatpush1.bf16.msra.mxu0 0
    %295 = vmatprep.subr.bf16.mxu0 0
    %296 = vmatpush1.bf16.msra.mxu0 0
    %297 = vmatprep.subr.bf16.mxu0 0
    %298 = vmatpush1.bf16.msra.mxu0 0
    %299 = vmatprep.subr.bf16.mxu0 0
    %300 = vmatpush1.bf16.msra.mxu0 0
    %301 = vmatprep.subr.bf16.mxu0 0
    %302 = vmatpush1.bf16.msra.mxu0 0
    %303 = vmatprep.subr.bf16.mxu0 0
    %304 = vmatpush1.bf16.msra.mxu0 0
    %305 = vmatprep.subr.bf16.mxu0 0
    %306 = vmatpush1.bf16.msra.mxu0 0
    %307 = vmatprep.mubr.bf16.mxu0 0
    %308 = vmatmul.mubr.bf16.gmra.mrb[0].mxu0 %v204
    %v309 = vpop.f32.mrb[0].mxu0
    %v310 = vadd.f32 %v225, %v309
    %v311 = vpop.f32.mrb[0].mxu0
    %v312 = vpop.f32.mrb[0].mxu0
    %v313 = vadd.f32 %v225, %v312
    %v314 = vpop.f32.mrb[0].mxu0
    %315 = vdwg.mxu0
    %v316 = vadd.f32 %v310, %v202
    %v317 = vadd.f32 %v313, %v203
    %v318 = vmax.f32 %v316, 0.0
    %v319 = vmax.f32 %v317, 0.0
    %v320 = vpack.c.bf16 %v319, %v318
    %v321 = vld [vmem:[#allocation6] sm:$0xf]
    %v322 = vld [vmem:[#allocation6 + $0x4] sm:$0xf]
    %v323 = vld [vmem:[#allocation6 + $0x8] sm:$0xf]
    %v324 = vld [vmem:[#allocation6 + $0xc] sm:$0xf]
    %v325 = vld [vmem:[#allocation6 + $0x10] sm:$0xf]
    %v326 = vld [vmem:[#allocation6 + $0x14] sm:$0xf]
    %v327 = vld [vmem:[#allocation6 + $0x18] sm:$0xf]
    %v328 = vld [vmem:[#allocation6 + $0x1c] sm:$0xf]
    %v329 = vld [vmem:[#allocation6 + $0x20] sm:$0xf]
    %v330 = vld [vmem:[#allocation6 + $0x24] sm:$0xf]
    %v331 = vld [vmem:[#allocation6 + $0x28] sm:$0xf]
    %v332 = vld [vmem:[#allocation6 + $0x2c] sm:$0xf]
    %v333 = vld [vmem:[#allocation6 + $0x30] sm:$0xf]
    %v334 = vld [vmem:[#allocation6 + $0x34] sm:$0xf]
    %v335 = vld [vmem:[#allocation6 + $0x38] sm:$0xf]
    %v336 = vld [vmem:[#allocation6 + $0x3c] sm:$0xf]
    %v338 = vlaneseq
    %v339 = vshrl.u32 %v338, 7
    %v340 = vsub.s32 0, %v339
    %v341 = vrot.slane %v83, %v340
    %v359 = vunpack.c.l.b16 %v321
    %v360 = vunpack.c.l.b16 %v322
    %v361 = vunpack.c.l.b16 %v323
    %v362 = vunpack.c.l.b16 %v324
    %v363 = vunpack.c.l.b16 %v325
    %v364 = vunpack.c.l.b16 %v326
    %v365 = vunpack.c.l.b16 %v327
    %v366 = vunpack.c.l.b16 %v328
    %v367 = vunpack.c.l.b16 %v329
    %v368 = vunpack.c.l.b16 %v330
    %v369 = vunpack.c.l.b16 %v331
    %v370 = vunpack.c.l.b16 %v332
    %v371 = vunpack.c.l.b16 %v333
    %v372 = vunpack.c.l.b16 %v334
    %v373 = vunpack.c.l.b16 %v335
    %v374 = vunpack.c.l.b16 %v336
    %v375 = vpack.c.b16 %v360, %v359
    %v376 = vpack.c.b16 %v362, %v361
    %v377 = vpack.c.b16 %v364, %v363
    %v378 = vpack.c.b16 %v366, %v365
    %v379 = vpack.c.b16 %v368, %v367
    %v380 = vpack.c.b16 %v370, %v369
    %v381 = vpack.c.b16 %v372, %v371
    %v382 = vpack.c.b16 %v374, %v373
    %391 = vmatprep.subr.bf16.mxu0 0
    %392 = vmatpush1.bf16.msra.mxu0 %v375
    %393 = vmatprep.subr.bf16.mxu0 0
    %394 = vmatpush1.bf16.msra.mxu0 %v376
    %395 = vmatprep.subr.bf16.mxu0 0
    %396 = vmatpush1.bf16.msra.mxu0 %v377
    %397 = vmatprep.subr.bf16.mxu0 0
    %398 = vmatpush1.bf16.msra.mxu0 %v378
    %399 = vmatprep.subr.bf16.mxu0 0
    %400 = vmatpush1.bf16.msra.mxu0 %v379
    %401 = vmatprep.subr.bf16.mxu0 0
    %402 = vmatpush1.bf16.msra.mxu0 %v380
    %403 = vmatprep.subr.bf16.mxu0 0
    %404 = vmatpush1.bf16.msra.mxu0 %v381
    %405 = vmatprep.subr.bf16.mxu0 0
    %406 = vmatpush1.bf16.msra.mxu0 %v382
    %407 = vmatprep.subr.bf16.mxu0 0
    %408 = vmatpush1.bf16.msra.mxu0 0
    %409 = vmatprep.subr.bf16.mxu0 0
    %410 = vmatpush1.bf16.msra.mxu0 0
    %411 = vmatprep.subr.bf16.mxu0 0
    %412 = vmatpush1.bf16.msra.mxu0 0
    %413 = vmatprep.subr.bf16.mxu0 0
    %414 = vmatpush1.bf16.msra.mxu0 0
    %415 = vmatprep.subr.bf16.mxu0 0
    %416 = vmatpush1.bf16.msra.mxu0 0
    %417 = vmatprep.subr.bf16.mxu0 0
    %418 = vmatpush1.bf16.msra.mxu0 0
    %419 = vmatprep.subr.bf16.mxu0 0
    %420 = vmatpush1.bf16.msra.mxu0 0
    %421 = vmatprep.subr.bf16.mxu0 0
    %422 = vmatpush1.bf16.msra.mxu0 0
    %423 = vmatprep.mubr.bf16.mxu0 0
    %424 = vmatmul.mubr.bf16.gmra.mrb[0].mxu0 %v320
    %v425 = vpop.f32.mrb[0].mxu0
    %v426 = vadd.f32 %v341, %v425
    %v427 = vpop.f32.mrb[0].mxu0
    %v428 = vpop.f32.mrb[0].mxu0
    %v429 = vadd.f32 %v341, %v428
    %v430 = vpop.f32.mrb[0].mxu0
    %431 = vdwg.mxu0
    %v432 = vadd.f32 %v426, %v318
    %v433 = vadd.f32 %v429, %v319
    %v434 = vmax.f32 %v432, 0.0
    %v435 = vmax.f32 %v433, 0.0
    %v436 = vpack.c.bf16 %v435, %v434
    %v437 = vld [vmem:[#allocation7] sm:$0xff]
    %v438 = vld [vmem:[#allocation7 + $0x8] sm:$0xff]
    %v439 = vld [vmem:[#allocation7 + $0x10] sm:$0xff]
    %v440 = vld [vmem:[#allocation7 + $0x18] sm:$0xff]
    %v441 = vld [vmem:[#allocation7 + $0x20] sm:$0xff]
    %v442 = vld [vmem:[#allocation7 + $0x28] sm:$0xff]
    %v443 = vld [vmem:[#allocation7 + $0x30] sm:$0xff]
    %v444 = vld [vmem:[#allocation7 + $0x38] sm:$0xff]
    %v445 = vld [vmem:[#allocation7 + $0x40] sm:$0xff]
    %v446 = vld [vmem:[#allocation7 + $0x48] sm:$0xff]
    %v447 = vld [vmem:[#allocation7 + $0x50] sm:$0xff]
    %v448 = vld [vmem:[#allocation7 + $0x58] sm:$0xff]
    %v449 = vld [vmem:[#allocation7 + $0x60] sm:$0xff]
    %v450 = vld [vmem:[#allocation7 + $0x68] sm:$0xff]
    %v451 = vld [vmem:[#allocation7 + $0x70] sm:$0xff]
    %v452 = vld [vmem:[#allocation7 + $0x78] sm:$0xff]
    %v454 = vlaneseq
    %v455 = vshrl.u32 %v454, 7
    %v456 = vsub.s32 0, %v455
    %v457 = vrot.slane %v84, %v456
    %v458 = vlaneseq
    %v459 = vshrl.u32 %v458, 7
    %v460 = vsub.s32 1, %v459
    %v461 = vrot.slane %v84, %v460
    %v480 = vunpack.c.l.b16 %v437
    %v481 = vunpack.c.h.b16 %v437
    %v482 = vunpack.c.l.b16 %v438
    %v483 = vunpack.c.h.b16 %v438
    %v484 = vunpack.c.l.b16 %v439
    %v485 = vunpack.c.h.b16 %v439
    %v486 = vunpack.c.l.b16 %v440
    %v487 = vunpack.c.h.b16 %v440
    %v488 = vunpack.c.l.b16 %v441
    %v489 = vunpack.c.h.b16 %v441
    %v490 = vunpack.c.l.b16 %v442
    %v491 = vunpack.c.h.b16 %v442
    %v492 = vunpack.c.l.b16 %v443
    %v493 = vunpack.c.h.b16 %v443
    %v494 = vunpack.c.l.b16 %v444
    %v495 = vunpack.c.h.b16 %v444
    %v496 = vunpack.c.l.b16 %v445
    %v497 = vunpack.c.h.b16 %v445
    %v498 = vunpack.c.l.b16 %v446
    %v499 = vunpack.c.h.b16 %v446
    %v500 = vunpack.c.l.b16 %v447
    %v501 = vunpack.c.h.b16 %v447
    %v502 = vunpack.c.l.b16 %v448
    %v503 = vunpack.c.h.b16 %v448
    %v504 = vunpack.c.l.b16 %v449
    %v505 = vunpack.c.h.b16 %v449
    %v506 = vunpack.c.l.b16 %v450
    %v507 = vunpack.c.h.b16 %v450
    %v508 = vunpack.c.l.b16 %v451
    %v509 = vunpack.c.h.b16 %v451
    %v510 = vunpack.c.l.b16 %v452
    %v511 = vunpack.c.h.b16 %v452
    %v512 = vpack.c.b16 %v482, %v480
    %v513 = vpack.c.b16 %v483, %v481
    %v514 = vpack.c.b16 %v486, %v484
    %v515 = vpack.c.b16 %v487, %v485
    %v516 = vpack.c.b16 %v490, %v488
    %v517 = vpack.c.b16 %v491, %v489
    %v518 = vpack.c.b16 %v494, %v492
    %v519 = vpack.c.b16 %v495, %v493
    %v520 = vpack.c.b16 %v498, %v496
    %v521 = vpack.c.b16 %v499, %v497
    %v522 = vpack.c.b16 %v502, %v500
    %v523 = vpack.c.b16 %v503, %v501
    %v524 = vpack.c.b16 %v506, %v504
    %v525 = vpack.c.b16 %v507, %v505
    %v526 = vpack.c.b16 %v510, %v508
    %v527 = vpack.c.b16 %v511, %v509
    %544 = vmatprep.subr.bf16.mxu0 %v513
    %545 = vmatpush1.bf16.msra.mxu0 %v512
    %546 = vmatprep.subr.bf16.mxu0 %v515
    %547 = vmatpush1.bf16.msra.mxu0 %v514
    %548 = vmatprep.subr.bf16.mxu0 %v517
    %549 = vmatpush1.bf16.msra.mxu0 %v516
    %550 = vmatprep.subr.bf16.mxu0 %v519
    %551 = vmatpush1.bf16.msra.mxu0 %v518
    %552 = vmatprep.subr.bf16.mxu0 %v521
    %553 = vmatpush1.bf16.msra.mxu0 %v520
    %554 = vmatprep.subr.bf16.mxu0 %v523
    %555 = vmatpush1.bf16.msra.mxu0 %v522
    %556 = vmatprep.subr.bf16.mxu0 %v525
    %557 = vmatpush1.bf16.msra.mxu0 %v524
    %558 = vmatprep.subr.bf16.mxu0 %v527
    %559 = vmatpush1.bf16.msra.mxu0 %v526
    %560 = vmatprep.subr.bf16.mxu0 0
    %561 = vmatpush1.bf16.msra.mxu0 0
    %562 = vmatprep.subr.bf16.mxu0 0
    %563 = vmatpush1.bf16.msra.mxu0 0
    %564 = vmatprep.subr.bf16.mxu0 0
    %565 = vmatpush1.bf16.msra.mxu0 0
    %566 = vmatprep.subr.bf16.mxu0 0
    %567 = vmatpush1.bf16.msra.mxu0 0
    %568 = vmatprep.subr.bf16.mxu0 0
    %569 = vmatpush1.bf16.msra.mxu0 0
    %570 = vmatprep.subr.bf16.mxu0 0
    %571 = vmatpush1.bf16.msra.mxu0 0
    %572 = vmatprep.subr.bf16.mxu0 0
    %573 = vmatpush1.bf16.msra.mxu0 0
    %574 = vmatprep.subr.bf16.mxu0 0
    %575 = vmatpush1.bf16.msra.mxu0 0
    %576 = vmatprep.mubr.bf16.mxu0 0
    %577 = vmatmul.mubr.bf16.gmra.mrb[0].mxu0 %v436
    %v578 = vpop.f32.mrb[0].mxu0
    %v579 = vadd.f32 %v457, %v578
    %v580 = vpop.f32.mrb[0].mxu0
    %v581 = vadd.f32 %v461, %v580
    %v582 = vpop.f32.mrb[0].mxu0
    %v583 = vadd.f32 %v457, %v582
    %v584 = vpop.f32.mrb[0].mxu0
    %v585 = vadd.f32 %v461, %v584
    %586 = vdwg.mxu0
    %587 = vst [vmem:[%s6] sm:$0xff] %v579
    %588 = vst [vmem:[%s6 + $0x8] sm:$0xff] %v581
    %589 = vst [vmem:[%s6 + $0x10] sm:$0xff] %v583
    %590 = vst [vmem:[%s6 + $0x18] sm:$0xff] %v585
    // Predicated region
    $region42: #{_forward_impl.1} parent=1 // pred_check
      _
    $region43: #{_forward_impl.1} parent=1 // pred_check_branch
      %592 = sbr.rel (0) target = $region45
    $region44: #{_forward_impl.1} parent=1 // pred_region
      _
    $region45: #{_forward_impl.1} parent=1 // pred_fallthru
      _
    // Predicated region
    $region46: #{_forward_impl.1} parent=1 // pred_check
      _
    $region47: #{_forward_impl.1} parent=1 // pred_check_branch
      %594 = sbr.rel (0) target = $region49
    $region48: #{_forward_impl.1} parent=1 // pred_region
      _
    $region49: #{_forward_impl.1} parent=1 // pred_fallthru
      _
    %595 = vsyncpa [#allocation3], 1
    %596 = vsyncpa [#allocation5], 1
    %597 = vsyncpa [#allocation8], 1

</llo_original>
